<compile_context>
chip_gen: v7x
topology: tpu7x:2x2x1
jax: 0.10.0
libtpu: 0.0.40
codegen_flags: <defaults>
</compile_context>

<pallas_src>
import functools
import math

import jax
import jax.numpy as jnp
from jax import lax
from jax.experimental import pallas as pl
from jax.experimental.pallas import tpu as pltpu


def _mha_kernel(q_ref, k_ref, v_ref,
                wq_ref, bq_ref, wk_ref, bk_ref, wv_ref, bv_ref,
                wo_ref, bo_ref,
                out_ref, attn_ref,
                kproj_ref, vproj_ref, ctx_ref,
                *, n_head, head_dim, approx_recip, exp_in_compute_dtype):
    """One (batch, q-tile) grid step.  Shapes after None-squeeze:
         q_ref [TQ, H], k_ref/v_ref [S, H] (per batch),
         wq/wk/wv/wo_ref [H, H] (compute dtype), b*_ref [1, H] (f32),
         out_ref [TQ, H] f32, attn_ref [n_head, TQ, S],
         kproj_ref/vproj_ref [S, H] scratch (compute dtype, valid for the whole batch),
         ctx_ref [TQ, H] scratch (compute dtype).
    """
    qi = pl.program_id(1)
    cd = q_ref.dtype
    f32 = jnp.float32

    # --- K/V projections: hoisted, computed once per batch as full-width (N = H) matmuls. ---
    @pl.when(qi == 0)
    def _project_kv():
        k_all = jnp.dot(k_ref[...], wk_ref[...], preferred_element_type=f32) + bk_ref[...]
        v_all = jnp.dot(v_ref[...], wv_ref[...], preferred_element_type=f32) + bv_ref[...]
        kproj_ref[...] = k_all.astype(cd)
        vproj_ref[...] = v_all.astype(cd)

    # --- Q projection: full-width per q-tile (1/sqrt(H) folded into wq/bq on the host). ---
    q_all = (jnp.dot(q_ref[...], wq_ref[...], preferred_element_type=f32)
             + bq_ref[...]).astype(cd)                                       # [TQ, H]

    # --- per-head scaled dot-product attention (static unroll; n_head is small). ---
    for h in range(n_head):
        lo = h * head_dim
        hi = lo + head_dim
        q_h = q_all[:, lo:hi]                      # [TQ, hd]
        k_h = kproj_ref[:, lo:hi]                  # [S,  hd]
        v_h = vproj_ref[:, lo:hi]                  # [S,  hd]

        # energy = Qh @ Kh^T: contract the last dims of both operands (no explicit transpose).
        energy = lax.dot_general(q_h, k_h,
                                 dimension_numbers=(((1,), (1,)), ((), ())),
                                 preferred_element_type=f32)                 # [TQ, S]

        # TODO(synk): mask=None path only; an additive mask would be applied to `energy` here.
        m = jnp.max(energy, axis=-1, keepdims=True)
        x = energy - m
        if exp_in_compute_dtype:
            e = jnp.exp(x.astype(cd)).astype(f32)   # bf16 exp: ~2x EUP throughput on v6e/v7x
        else:
            e = jnp.exp(x)
        denom = jnp.sum(e, axis=-1, keepdims=True)
        if approx_recip:
            p = e * pl.reciprocal(denom, approx=True)   # EUP slot; avoids TQ*S VPU divides
        else:
            p = e / denom

        attn_ref[h] = p.astype(attn_ref.dtype)

        # TODO(synk): attention dropout omitted (eval-mode identity).
        ctx_h = jnp.dot(p.astype(cd), v_h, preferred_element_type=f32)       # [TQ, hd]
        ctx_ref[:, lo:hi] = ctx_h.astype(cd)

    # --- output projection: one full-K (K = H) matmul instead of n_head K=hd matmuls. ---
    out = jnp.dot(ctx_ref[...], wo_ref[...], preferred_element_type=f32) + bo_ref[...]
    out_ref[...] = out.astype(out_ref.dtype)


def multi_head_attention(q, k, v, params, n_head, *,
                         compute_dtype=jnp.bfloat16,
                         attn_dtype=jnp.bfloat16,
                         block_q=None,
                         approx_recip=True,
                         exp_in_compute_dtype=None):
    """q, k, v: [B, S, H] float32.
    Returns (out [B,S,H] float32, attention [B,n_head,S,S] attn_dtype)."""
    B, S, H = q.shape
    assert H % n_head == 0
    hd = H // n_head
    inv_scale = 1.0 / math.sqrt(float(H))   # module scales by sqrt(hid_dim), not sqrt(head_dim)

    cd = jnp.dtype(compute_dtype)
    f32 = jnp.float32
    if exp_in_compute_dtype is None:
        exp_in_compute_dtype = (cd == jnp.dtype(jnp.bfloat16))   # only on the bf16 fast path

    # ---- host-side prep: fold 1/sqrt(H) into the Q projection, cast weights once ----
    wq = (params["wq"] * inv_scale).astype(cd)
    wk = params["wk"].astype(cd)
    wv = params["wv"].astype(cd)
    wo = params["wo"].astype(cd)
    bq = (params["bq"] * inv_scale).astype(f32)
    bk = params["bk"].astype(f32)
    bv = params["bv"].astype(f32)
    bo = params["bo"].astype(f32)

    # ---- generation-aware VMEM budget & q-tile selection ----
    cdb = cd.itemsize
    adb = jnp.dtype(attn_dtype).itemsize
    try:
        vmem_cap = int(pltpu.get_tpu_info().vmem_capacity_bytes)  # 128 MiB v5e/v6e, 64 MiB/TC v7x
    except Exception:
        vmem_cap = 128 * 2**20
    budget = max(16 * 2**20, vmem_cap - 12 * 2**20)               # leave compiler/pipeline headroom

    def vmem_estimate(tq):
        blocks = 2 * (                            # x2: BlockSpec double buffering
            tq * H * cdb                          # q tile
            + 2 * S * H * cdb                     # k, v tiles (TODO(synk): single-copy via pl.ANY + manual DMA on v7x)
            + 4 * H * H * cdb + 4 * H * 4         # weights + f32 biases
            + tq * H * 4                          # out tile (f32)
            + n_head * tq * S * adb               # attention tile
        )
        scratch = 2 * S * H * cdb + tq * H * cdb  # kproj, vproj, ctx
        temps = 4 * tq * S * 4 + 2 * S * H * 4    # softmax temporaries + qi==0 projection temps
        return blocks + scratch + temps

    try:
        kind = jax.devices()[0].device_kind.lower()
    except Exception:
        kind = ""
    is_v5e = ("v5 lite" in kind) or ("v5e" in kind) or ("v5litepod" in kind)

    if block_q is None:
        if S % 128 == 0 and S > 128:
            block_q = 128
            # v6e/v7x MXUs are 256-wide: prefer 256-row q-tiles when S and the VMEM budget allow.
            if (not is_v5e) and S % 256 == 0 and vmem_estimate(256) <= budget:
                block_q = 256
        else:
            block_q = S
    assert S % block_q == 0
    n_q = S // block_q

    vmem_limit = int(min(budget, max(32 * 2**20, vmem_estimate(block_q) + 4 * 2**20)))

    # TODO(synk): for very long S, switch to an online-softmax (flash) formulation that tiles K/V
    # along S instead of keeping the full [S, H] projections resident.
    # NOTE: for lane-dense (unmasked) stores, real configs should keep S and H multiples of 128;
    # small demo shapes fall back to masked partial stores.

    q_spec    = pl.BlockSpec((None, block_q, H), lambda b, i: (b, i, 0))
    kv_spec   = pl.BlockSpec((None, S, H),       lambda b, i: (b, 0, 0))
    w_spec    = pl.BlockSpec((H, H),             lambda b, i: (0, 0))
    b_spec    = pl.BlockSpec((1, H),             lambda b, i: (0, 0))
    out_spec  = pl.BlockSpec((None, block_q, H), lambda b, i: (b, i, 0))
    attn_spec = pl.BlockSpec((None, n_head, block_q, S), lambda b, i: (b, 0, i, 0))

    kernel = functools.partial(_mha_kernel, n_head=n_head, head_dim=hd,
                               approx_recip=approx_recip,
                               exp_in_compute_dtype=exp_in_compute_dtype)

    out, attn = pl.pallas_call(
        kernel,
        out_shape=(
            jax.ShapeDtypeStruct((B, S, H), jnp.float32),
            jax.ShapeDtypeStruct((B, n_head, S, S), attn_dtype),
        ),
        grid=(B, n_q),
        in_specs=[
            q_spec, kv_spec, kv_spec,
            w_spec, b_spec,      # fc_q (scale folded)
            w_spec, b_spec,      # fc_k
            w_spec, b_spec,      # fc_v
            w_spec, b_spec,      # fc_o
        ],
        out_specs=(out_spec, attn_spec),
        scratch_shapes=[
            pltpu.VMEM((S, H), cd),         # K projection (valid for the whole batch)
            pltpu.VMEM((S, H), cd),         # V projection
            pltpu.VMEM((block_q, H), cd),   # per-head contexts gathered at lane offsets
        ],
        compiler_params=pltpu.CompilerParams(
            # batch axis is megacore-parallel; the q-tile axis must stay sequential ("arbitrary")
            # so the qi == 0 step that fills the K/V scratch runs before the other tiles of a batch.
            # TODO(synk): for B == 1 and n_q == 1 one v7x core idles; split block_q to expose >=2 blocks.
            dimension_semantics=("parallel", "arbitrary"),
            vmem_limit_bytes=vmem_limit,
        ),
    )(q.astype(cd), k.astype(cd), v.astype(cd),
      wq, bq, wk, bk, wv, bv, wo, bo)
    return out, attn


def _init_params(key, hid_dim):
    """Deterministic init mimicking nn.Linear default: U(-1/sqrt(in), 1/sqrt(in)).
    Weights are stored pre-transposed ([in, out]) so the kernel computes x @ W + b."""
    bound = 1.0 / math.sqrt(hid_dim)
    names = ["wq", "bq", "wk", "bk", "wv", "bv", "wo", "bo"]
    keys = jax.random.split(key, len(names))
    params = {}
    for n, kk in zip(names, keys):
        shape = (hid_dim, hid_dim) if n.startswith("w") else (1, hid_dim)
        params[n] = jax.random.uniform(kk, shape, jnp.float32, -bound, bound)
    return params


def _reference(q, k, v, params, n_head):
    """Pure-JAX f32 reference matching the PyTorch forward (mask=None, eval dropout)."""
    B, S, H = q.shape
    hd = H // n_head
    scale = math.sqrt(float(H))

    def proj(x, w, b):
        return x @ w + b

    Q = proj(q, params["wq"], params["bq"]).reshape(B, S, n_head, hd).transpose(0, 2, 1, 3)
    K = proj(k, params["wk"], params["bk"]).reshape(B, S, n_head, hd).transpose(0, 2, 1, 3)
    V = proj(v, params["wv"], params["bv"]).reshape(B, S, n_head, hd).transpose(0, 2, 1, 3)
    energy = jnp.einsum("bhqd,bhkd->bhqk", Q, K) / scale
    attn = jax.nn.softmax(energy, axis=-1)
    x = jnp.einsum("bhqk,bhkd->bhqd", attn, V)
    x = x.transpose(0, 2, 1, 3).reshape(B, S, H)
    out = x @ params["wo"] + params["bo"]
    return out, attn


if __name__ == "__main__":
    B, S, H, n_head = 2, 8, 32, 4

    key = jax.random.PRNGKey(0)
    kq, kk, kv, kp = jax.random.split(key, 4)
    q = jax.random.normal(kq, (B, S, H), jnp.float32)
    k = jax.random.normal(kk, (B, S, H), jnp.float32)
    v = jax.random.normal(kv, (B, S, H), jnp.float32)
    params = _init_params(kp, H)

    ref_out, ref_attn = _reference(q, k, v, params, n_head)

    # 1) f32 compute path: strict semantic check against the module's f32 forward.
    out32, attn32 = multi_head_attention(q, k, v, params, n_head,
                                         compute_dtype=jnp.float32,
                                         attn_dtype=jnp.float32,
                                         approx_recip=False)
    jax.block_until_ready((out32, attn32))
    assert jnp.allclose(out32, ref_out, atol=1e-4, rtol=1e-4), "f32 output mismatch"
    assert jnp.allclose(attn32, ref_attn, atol=1e-4, rtol=1e-4), "f32 attention mismatch"

    # 2) default fast path (bf16 matmul operands + bf16 exp + bf16 attention, approx reciprocal):
    #    loose sanity check against the f32 reference (bf16-level tolerances).
    out16, attn16 = multi_head_attention(q, k, v, params, n_head)
    jax.block_until_ready((out16, attn16))
    assert out16.dtype == jnp.float32 and attn16.dtype == jnp.bfloat16
    assert jnp.allclose(out16, ref_out, atol=1e-1, rtol=1e-1), "bf16 output mismatch"
    assert jnp.allclose(attn16.astype(jnp.float32), ref_attn, atol=3e-2, rtol=3e-2), \
        "bf16 attention mismatch"

    print("KERNEL_OK")
</pallas_src>

<mosaic_0001>
module attributes {stable_mosaic.version = 11 : i64} {
  func.func @_mha_kernel(%arg0: i32, %arg1: i32, %arg2: memref<1x8x32xf32, #tpu.memory_space<vmem>>, %arg3: memref<1x8x32xf32, #tpu.memory_space<vmem>>, %arg4: memref<1x8x32xf32, #tpu.memory_space<vmem>>, %arg5: memref<32x32xf32, #tpu.memory_space<vmem>>, %arg6: memref<1x32xf32, #tpu.memory_space<vmem>>, %arg7: memref<32x32xf32, #tpu.memory_space<vmem>>, %arg8: memref<1x32xf32, #tpu.memory_space<vmem>>, %arg9: memref<32x32xf32, #tpu.memory_space<vmem>>, %arg10: memref<1x32xf32, #tpu.memory_space<vmem>>, %arg11: memref<32x32xf32, #tpu.memory_space<vmem>>, %arg12: memref<1x32xf32, #tpu.memory_space<vmem>>, %arg13: memref<1x8x32xf32, #tpu.memory_space<vmem>>, %arg14: memref<1x4x8x8xf32, #tpu.memory_space<vmem>>, %arg15: memref<8x32xf32, #tpu.memory_space<vmem>>, %arg16: memref<8x32xf32, #tpu.memory_space<vmem>>, %arg17: memref<8x32xf32, #tpu.memory_space<vmem>>) attributes {dimension_semantics = [#tpu.dimension_semantics<parallel>, #tpu.dimension_semantics<arbitrary>], iteration_bounds = array<i64: 2, 1>, scalar_prefetch = 0 : i64, scratch_operands = 3 : i64, tpu.core_type = #tpu.core_type<tc>, window_params = [{transform_indices = @transform_0, window_bounds = array<i64: 1, 8, 32>}, {transform_indices = @transform_1, window_bounds = array<i64: 1, 8, 32>}, {transform_indices = @transform_2, window_bounds = array<i64: 1, 8, 32>}, {pipeline_mode = #tpu.pipeline_mode<synchronous>, transform_indices = @transform_3, window_bounds = array<i64: 32, 32>}, {pipeline_mode = #tpu.pipeline_mode<synchronous>, transform_indices = @transform_4, window_bounds = array<i64: 1, 32>}, {pipeline_mode = #tpu.pipeline_mode<synchronous>, transform_indices = @transform_5, window_bounds = array<i64: 32, 32>}, {pipeline_mode = #tpu.pipeline_mode<synchronous>, transform_indices = @transform_6, window_bounds = array<i64: 1, 32>}, {pipeline_mode = #tpu.pipeline_mode<synchronous>, transform_indices = @transform_7, window_bounds = array<i64: 32, 32>}, {pipeline_mode = #tpu.pipeline_mode<synchronous>, transform_indices = @transform_8, window_bounds = array<i64: 1, 32>}, {pipeline_mode = #tpu.pipeline_mode<synchronous>, transform_indices = @transform_9, window_bounds = array<i64: 32, 32>}, {pipeline_mode = #tpu.pipeline_mode<synchronous>, transform_indices = @transform_10, window_bounds = array<i64: 1, 32>}, {transform_indices = @transform_11, window_bounds = array<i64: 1, 8, 32>}, {transform_indices = @transform_12, window_bounds = array<i64: 1, 4, 8, 8>}]} {
    %c0_i32 = arith.constant 0 : i32
    %0 = arith.cmpi eq, %arg1, %c0_i32 : i32
    %1 = arith.extui %0 : i1 to i32
    %c0_i32_0 = arith.constant 0 : i32
    %2 = arith.cmpi ne, %1, %c0_i32_0 : i32
    scf.if %2 {
      %c0_67 = arith.constant 0 : index
      %c0_68 = arith.constant 0 : index
      %c0_69 = arith.constant 0 : index
      %91 = vector.load %arg3[%c0_67, %c0_68, %c0_69] : memref<1x8x32xf32, #tpu.memory_space<vmem>>, vector<1x8x32xf32>
      %92 = vector.shape_cast %91 : vector<1x8x32xf32> to vector<8x32xf32>
      %c0_70 = arith.constant 0 : index
      %c0_71 = arith.constant 0 : index
      %93 = vector.load %arg7[%c0_70, %c0_71] : memref<32x32xf32, #tpu.memory_space<vmem>>, vector<32x32xf32>
      %cst_72 = arith.constant dense<0.000000e+00> : vector<8x32xf32>
      %94 = tpu.matmul %92, %93, %cst_72 {dimension_numbers = #tpu.dot_dimension_numbers<[1], [0], [0], [1], [0, 0, 1, 1], [], []>} : vector<8x32xf32>, vector<32x32xf32>, vector<8x32xf32> -> vector<8x32xf32>
      %c0_73 = arith.constant 0 : index
      %c0_74 = arith.constant 0 : index
      %95 = vector.load %arg8[%c0_73, %c0_74] : memref<1x32xf32, #tpu.memory_space<vmem>>, vector<1x32xf32>
      %96 = vector.broadcast %95 : vector<1x32xf32> to vector<8x32xf32>
      %97 = arith.addf %94, %96 : vector<8x32xf32>
      %c0_75 = arith.constant 0 : index
      %c0_76 = arith.constant 0 : index
      %c0_77 = arith.constant 0 : index
      %98 = vector.load %arg4[%c0_75, %c0_76, %c0_77] : memref<1x8x32xf32, #tpu.memory_space<vmem>>, vector<1x8x32xf32>
      %99 = vector.shape_cast %98 : vector<1x8x32xf32> to vector<8x32xf32>
      %c0_78 = arith.constant 0 : index
      %c0_79 = arith.constant 0 : index
      %100 = vector.load %arg9[%c0_78, %c0_79] : memref<32x32xf32, #tpu.memory_space<vmem>>, vector<32x32xf32>
      %cst_80 = arith.constant dense<0.000000e+00> : vector<8x32xf32>
      %101 = tpu.matmul %99, %100, %cst_80 {dimension_numbers = #tpu.dot_dimension_numbers<[1], [0], [0], [1], [0, 0, 1, 1], [], []>} : vector<8x32xf32>, vector<32x32xf32>, vector<8x32xf32> -> vector<8x32xf32>
      %c0_81 = arith.constant 0 : index
      %c0_82 = arith.constant 0 : index
      %102 = vector.load %arg10[%c0_81, %c0_82] : memref<1x32xf32, #tpu.memory_space<vmem>>, vector<1x32xf32>
      %103 = vector.broadcast %102 : vector<1x32xf32> to vector<8x32xf32>
      %104 = arith.addf %101, %103 : vector<8x32xf32>
      %c0_83 = arith.constant 0 : index
      %c0_84 = arith.constant 0 : index
      %105 = vector.load %arg15[%c0_83, %c0_84] : memref<8x32xf32, #tpu.memory_space<vmem>>, vector<8x32xf32>
      tpu.vector_store %arg15[%c0_83, %c0_84], %97 {strides = array<i32>} : memref<8x32xf32, #tpu.memory_space<vmem>>, vector<8x32xf32>,
      %c0_85 = arith.constant 0 : index
      %c0_86 = arith.constant 0 : index
      %106 = vector.load %arg16[%c0_85, %c0_86] : memref<8x32xf32, #tpu.memory_space<vmem>>, vector<8x32xf32>
      tpu.vector_store %arg16[%c0_85, %c0_86], %104 {strides = array<i32>} : memref<8x32xf32, #tpu.memory_space<vmem>>, vector<8x32xf32>,
    } else {
    }
    %c0 = arith.constant 0 : index
    %c0_1 = arith.constant 0 : index
    %c0_2 = arith.constant 0 : index
    %3 = vector.load %arg2[%c0, %c0_1, %c0_2] : memref<1x8x32xf32, #tpu.memory_space<vmem>>, vector<1x8x32xf32>
    %4 = vector.shape_cast %3 : vector<1x8x32xf32> to vector<8x32xf32>
    %c0_3 = arith.constant 0 : index
    %c0_4 = arith.constant 0 : index
    %5 = vector.load %arg5[%c0_3, %c0_4] : memref<32x32xf32, #tpu.memory_space<vmem>>, vector<32x32xf32>
    %cst = arith.constant dense<0.000000e+00> : vector<8x32xf32>
    %6 = tpu.matmul %4, %5, %cst {dimension_numbers = #tpu.dot_dimension_numbers<[1], [0], [0], [1], [0, 0, 1, 1], [], []>} : vector<8x32xf32>, vector<32x32xf32>, vector<8x32xf32> -> vector<8x32xf32>
    %c0_5 = arith.constant 0 : index
    %c0_6 = arith.constant 0 : index
    %7 = vector.load %arg6[%c0_5, %c0_6] : memref<1x32xf32, #tpu.memory_space<vmem>>, vector<1x32xf32>
    %8 = vector.broadcast %7 : vector<1x32xf32> to vector<8x32xf32>
    %9 = arith.addf %6, %8 : vector<8x32xf32>
    %10 = vector.extract_strided_slice %9 {offsets = [0, 0], sizes = [8, 8], strides = [1, 1]} : vector<8x32xf32> to vector<8x8xf32>
    %c0_7 = arith.constant 0 : index
    %c0_8 = arith.constant 0 : index
    %11 = vector.load %arg15[%c0_7, %c0_8] : memref<8x32xf32, #tpu.memory_space<vmem>>, vector<8x8xf32>
    %c0_9 = arith.constant 0 : index
    %c0_10 = arith.constant 0 : index
    %12 = vector.load %arg16[%c0_9, %c0_10] : memref<8x32xf32, #tpu.memory_space<vmem>>, vector<8x8xf32>
    %cst_11 = arith.constant dense<0.000000e+00> : vector<8x8xf32>
    %13 = tpu.matmul %10, %11, %cst_11 {dimension_numbers = #tpu.dot_dimension_numbers<[1], [1], [0], [0], [0, 0, 1, 0], [], []>} : vector<8x8xf32>, vector<8x8xf32>, vector<8x8xf32> -> vector<8x8xf32>
    %cst_12 = arith.constant dense<0xFF800000> : vector<8xf32>
    %14 = vector.multi_reduction <maximumf>, %13, %cst_12 [1] : vector<8x8xf32> to vector<8xf32>
    %15 = vector.shape_cast %14 : vector<8xf32> to vector<8x1xf32>
    %16 = vector.broadcast %15 : vector<8x1xf32> to vector<8x8xf32>
    %17 = arith.subf %13, %16 : vector<8x8xf32>
    %18 = math.exp %17 : vector<8x8xf32>
    %cst_13 = arith.constant dense<0.000000e+00> : vector<8xf32>
    %19 = vector.multi_reduction <add>, %18, %cst_13 [1] : vector<8x8xf32> to vector<8xf32>
    %20 = vector.shape_cast %19 : vector<8xf32> to vector<8x1xf32>
    %21 = vector.broadcast %20 : vector<8x1xf32> to vector<8x8xf32>
    %22 = arith.divf %18, %21 : vector<8x8xf32>
    %c0_14 = arith.constant 0 : index
    %c0_15 = arith.constant 0 : index
    %c0_16 = arith.constant 0 : index
    %c0_17 = arith.constant 0 : index
    %23 = vector.load %arg14[%c0_14, %c0_15, %c0_16, %c0_17] : memref<1x4x8x8xf32, #tpu.memory_space<vmem>>, vector<1x1x8x8xf32>
    %24 = vector.shape_cast %23 : vector<1x1x8x8xf32> to vector<8x8xf32>
    %25 = vector.shape_cast %22 : vector<8x8xf32> to vector<1x1x8x8xf32>
    tpu.vector_store %arg14[%c0_14, %c0_15, %c0_16, %c0_17], %25 {strides = array<i32>} : memref<1x4x8x8xf32, #tpu.memory_space<vmem>>, vector<1x1x8x8xf32>,
    %cst_18 = arith.constant dense<0.000000e+00> : vector<8x8xf32>
    %26 = tpu.matmul %22, %12, %cst_18 {dimension_numbers = #tpu.dot_dimension_numbers<[1], [0], [0], [1], [0, 0, 1, 1], [], []>} : vector<8x8xf32>, vector<8x8xf32>, vector<8x8xf32> -> vector<8x8xf32>
    %c0_19 = arith.constant 0 : index
    %c0_20 = arith.constant 0 : index
    %27 = vector.load %arg17[%c0_19, %c0_20] : memref<8x32xf32, #tpu.memory_space<vmem>>, vector<8x8xf32>
    tpu.vector_store %arg17[%c0_19, %c0_20], %26 {strides = array<i32>} : memref<8x32xf32, #tpu.memory_space<vmem>>, vector<8x8xf32>,
    %28 = vector.extract_strided_slice %9 {offsets = [0, 8], sizes = [8, 8], strides = [1, 1]} : vector<8x32xf32> to vector<8x8xf32>
    %c0_21 = arith.constant 0 : index
    %c8 = arith.constant 8 : index
    %29 = vector.load %arg15[%c0_21, %c8] : memref<8x32xf32, #tpu.memory_space<vmem>>, vector<8x8xf32>
    %c0_22 = arith.constant 0 : index
    %c8_23 = arith.constant 8 : index
    %30 = vector.load %arg16[%c0_22, %c8_23] : memref<8x32xf32, #tpu.memory_space<vmem>>, vector<8x8xf32>
    %cst_24 = arith.constant dense<0.000000e+00> : vector<8x8xf32>
    %31 = tpu.matmul %28, %29, %cst_24 {dimension_numbers = #tpu.dot_dimension_numbers<[1], [1], [0], [0], [0, 0, 1, 0], [], []>} : vector<8x8xf32>, vector<8x8xf32>, vector<8x8xf32> -> vector<8x8xf32>
    %cst_25 = arith.constant dense<0xFF800000> : vector<8xf32>
    %32 = vector.multi_reduction <maximumf>, %31, %cst_25 [1] : vector<8x8xf32> to vector<8xf32>
    %33 = vector.shape_cast %32 : vector<8xf32> to vector<8x1xf32>
    %34 = vector.broadcast %33 : vector<8x1xf32> to vector<8x8xf32>
    %35 = arith.subf %31, %34 : vector<8x8xf32>
    %36 = math.exp %35 : vector<8x8xf32>
    %cst_26 = arith.constant dense<0.000000e+00> : vector<8xf32>
    %37 = vector.multi_reduction <add>, %36, %cst_26 [1] : vector<8x8xf32> to vector<8xf32>
    %38 = vector.shape_cast %37 : vector<8xf32> to vector<8x1xf32>
    %39 = vector.broadcast %38 : vector<8x1xf32> to vector<8x8xf32>
    %40 = arith.divf %36, %39 : vector<8x8xf32>
    %c0_27 = arith.constant 0 : index
    %c1 = arith.constant 1 : index
    %c0_28 = arith.constant 0 : index
    %c0_29 = arith.constant 0 : index
    %41 = vector.load %arg14[%c0_27, %c1, %c0_28, %c0_29] : memref<1x4x8x8xf32, #tpu.memory_space<vmem>>, vector<1x1x8x8xf32>
    %42 = vector.shape_cast %41 : vector<1x1x8x8xf32> to vector<8x8xf32>
    %43 = vector.shape_cast %40 : vector<8x8xf32> to vector<1x1x8x8xf32>
    tpu.vector_store %arg14[%c0_27, %c1, %c0_28, %c0_29], %43 {strides = array<i32>} : memref<1x4x8x8xf32, #tpu.memory_space<vmem>>, vector<1x1x8x8xf32>,
    %cst_30 = arith.constant dense<0.000000e+00> : vector<8x8xf32>
    %44 = tpu.matmul %40, %30, %cst_30 {dimension_numbers = #tpu.dot_dimension_numbers<[1], [0], [0], [1], [0, 0, 1, 1], [], []>} : vector<8x8xf32>, vector<8x8xf32>, vector<8x8xf32> -> vector<8x8xf32>
    %c0_31 = arith.constant 0 : index
    %c8_32 = arith.constant 8 : index
    %45 = vector.load %arg17[%c0_31, %c8_32] : memref<8x32xf32, #tpu.memory_space<vmem>>, vector<8x8xf32>
    tpu.vector_store %arg17[%c0_31, %c8_32], %44 {strides = array<i32>} : memref<8x32xf32, #tpu.memory_space<vmem>>, vector<8x8xf32>,
    %46 = vector.extract_strided_slice %9 {offsets = [0, 16], sizes = [8, 8], strides = [1, 1]} : vector<8x32xf32> to vector<8x8xf32>
    %c0_33 = arith.constant 0 : index
    %c16 = arith.constant 16 : index
    %47 = vector.load %arg15[%c0_33, %c16] : memref<8x32xf32, #tpu.memory_space<vmem>>, vector<8x8xf32>
    %c0_34 = arith.constant 0 : index
    %c16_35 = arith.constant 16 : index
    %48 = vector.load %arg16[%c0_34, %c16_35] : memref<8x32xf32, #tpu.memory_space<vmem>>, vector<8x8xf32>
    %cst_36 = arith.constant dense<0.000000e+00> : vector<8x8xf32>
    %49 = tpu.matmul %46, %47, %cst_36 {dimension_numbers = #tpu.dot_dimension_numbers<[1], [1], [0], [0], [0, 0, 1, 0], [], []>} : vector<8x8xf32>, vector<8x8xf32>, vector<8x8xf32> -> vector<8x8xf32>
    %cst_37 = arith.constant dense<0xFF800000> : vector<8xf32>
    %50 = vector.multi_reduction <maximumf>, %49, %cst_37 [1] : vector<8x8xf32> to vector<8xf32>
    %51 = vector.shape_cast %50 : vector<8xf32> to vector<8x1xf32>
    %52 = vector.broadcast %51 : vector<8x1xf32> to vector<8x8xf32>
    %53 = arith.subf %49, %52 : vector<8x8xf32>
    %54 = math.exp %53 : vector<8x8xf32>
    %cst_38 = arith.constant dense<0.000000e+00> : vector<8xf32>
    %55 = vector.multi_reduction <add>, %54, %cst_38 [1] : vector<8x8xf32> to vector<8xf32>
    %56 = vector.shape_cast %55 : vector<8xf32> to vector<8x1xf32>
    %57 = vector.broadcast %56 : vector<8x1xf32> to vector<8x8xf32>
    %58 = arith.divf %54, %57 : vector<8x8xf32>
    %c0_39 = arith.constant 0 : index
    %c2 = arith.constant 2 : index
    %c0_40 = arith.constant 0 : index
    %c0_41 = arith.constant 0 : index
    %59 = vector.load %arg14[%c0_39, %c2, %c0_40, %c0_41] : memref<1x4x8x8xf32, #tpu.memory_space<vmem>>, vector<1x1x8x8xf32>
    %60 = vector.shape_cast %59 : vector<1x1x8x8xf32> to vector<8x8xf32>
    %61 = vector.shape_cast %58 : vector<8x8xf32> to vector<1x1x8x8xf32>
    tpu.vector_store %arg14[%c0_39, %c2, %c0_40, %c0_41], %61 {strides = array<i32>} : memref<1x4x8x8xf32, #tpu.memory_space<vmem>>, vector<1x1x8x8xf32>,
    %cst_42 = arith.constant dense<0.000000e+00> : vector<8x8xf32>
    %62 = tpu.matmul %58, %48, %cst_42 {dimension_numbers = #tpu.dot_dimension_numbers<[1], [0], [0], [1], [0, 0, 1, 1], [], []>} : vector<8x8xf32>, vector<8x8xf32>, vector<8x8xf32> -> vector<8x8xf32>
    %c0_43 = arith.constant 0 : index
    %c16_44 = arith.constant 16 : index
    %63 = vector.load %arg17[%c0_43, %c16_44] : memref<8x32xf32, #tpu.memory_space<vmem>>, vector<8x8xf32>
    tpu.vector_store %arg17[%c0_43, %c16_44], %62 {strides = array<i32>} : memref<8x32xf32, #tpu.memory_space<vmem>>, vector<8x8xf32>,
    %64 = vector.extract_strided_slice %9 {offsets = [0, 24], sizes = [8, 8], strides = [1, 1]} : vector<8x32xf32> to vector<8x8xf32>
    %c0_45 = arith.constant 0 : index
    %c24 = arith.constant 24 : index
    %65 = vector.load %arg15[%c0_45, %c24] : memref<8x32xf32, #tpu.memory_space<vmem>>, vector<8x8xf32>
    %c0_46 = arith.constant 0 : index
    %c24_47 = arith.constant 24 : index
    %66 = vector.load %arg16[%c0_46, %c24_47] : memref<8x32xf32, #tpu.memory_space<vmem>>, vector<8x8xf32>
    %cst_48 = arith.constant dense<0.000000e+00> : vector<8x8xf32>
    %67 = tpu.matmul %64, %65, %cst_48 {dimension_numbers = #tpu.dot_dimension_numbers<[1], [1], [0], [0], [0, 0, 1, 0], [], []>} : vector<8x8xf32>, vector<8x8xf32>, vector<8x8xf32> -> vector<8x8xf32>
    %cst_49 = arith.constant dense<0xFF800000> : vector<8xf32>
    %68 = vector.multi_reduction <maximumf>, %67, %cst_49 [1] : vector<8x8xf32> to vector<8xf32>
    %69 = vector.shape_cast %68 : vector<8xf32> to vector<8x1xf32>
    %70 = vector.broadcast %69 : vector<8x1xf32> to vector<8x8xf32>
    %71 = arith.subf %67, %70 : vector<8x8xf32>
    %72 = math.exp %71 : vector<8x8xf32>
    %cst_50 = arith.constant dense<0.000000e+00> : vector<8xf32>
    %73 = vector.multi_reduction <add>, %72, %cst_50 [1] : vector<8x8xf32> to vector<8xf32>
    %74 = vector.shape_cast %73 : vector<8xf32> to vector<8x1xf32>
    %75 = vector.broadcast %74 : vector<8x1xf32> to vector<8x8xf32>
    %76 = arith.divf %72, %75 : vector<8x8xf32>
    %c0_51 = arith.constant 0 : index
    %c3 = arith.constant 3 : index
    %c0_52 = arith.constant 0 : index
    %c0_53 = arith.constant 0 : index
    %77 = vector.load %arg14[%c0_51, %c3, %c0_52, %c0_53] : memref<1x4x8x8xf32, #tpu.memory_space<vmem>>, vector<1x1x8x8xf32>
    %78 = vector.shape_cast %77 : vector<1x1x8x8xf32> to vector<8x8xf32>
    %79 = vector.shape_cast %76 : vector<8x8xf32> to vector<1x1x8x8xf32>
    tpu.vector_store %arg14[%c0_51, %c3, %c0_52, %c0_53], %79 {strides = array<i32>} : memref<1x4x8x8xf32, #tpu.memory_space<vmem>>, vector<1x1x8x8xf32>,
    %cst_54 = arith.constant dense<0.000000e+00> : vector<8x8xf32>
    %80 = tpu.matmul %76, %66, %cst_54 {dimension_numbers = #tpu.dot_dimension_numbers<[1], [0], [0], [1], [0, 0, 1, 1], [], []>} : vector<8x8xf32>, vector<8x8xf32>, vector<8x8xf32> -> vector<8x8xf32>
    %c0_55 = arith.constant 0 : index
    %c24_56 = arith.constant 24 : index
    %81 = vector.load %arg17[%c0_55, %c24_56] : memref<8x32xf32, #tpu.memory_space<vmem>>, vector<8x8xf32>
    tpu.vector_store %arg17[%c0_55, %c24_56], %80 {strides = array<i32>} : memref<8x32xf32, #tpu.memory_space<vmem>>, vector<8x8xf32>,
    %c0_57 = arith.constant 0 : index
    %c0_58 = arith.constant 0 : index
    %82 = vector.load %arg17[%c0_57, %c0_58] : memref<8x32xf32, #tpu.memory_space<vmem>>, vector<8x32xf32>
    %c0_59 = arith.constant 0 : index
    %c0_60 = arith.constant 0 : index
    %83 = vector.load %arg11[%c0_59, %c0_60] : memref<32x32xf32, #tpu.memory_space<vmem>>, vector<32x32xf32>
    %cst_61 = arith.constant dense<0.000000e+00> : vector<8x32xf32>
    %84 = tpu.matmul %82, %83, %cst_61 {dimension_numbers = #tpu.dot_dimension_numbers<[1], [0], [0], [1], [0, 0, 1, 1], [], []>} : vector<8x32xf32>, vector<32x32xf32>, vector<8x32xf32> -> vector<8x32xf32>
    %c0_62 = arith.constant 0 : index
    %c0_63 = arith.constant 0 : index
    %85 = vector.load %arg12[%c0_62, %c0_63] : memref<1x32xf32, #tpu.memory_space<vmem>>, vector<1x32xf32>
    %86 = vector.broadcast %85 : vector<1x32xf32> to vector<8x32xf32>
    %87 = arith.addf %84, %86 : vector<8x32xf32>
    %c0_64 = arith.constant 0 : index
    %c0_65 = arith.constant 0 : index
    %c0_66 = arith.constant 0 : index
    %88 = vector.load %arg13[%c0_64, %c0_65, %c0_66] : memref<1x8x32xf32, #tpu.memory_space<vmem>>, vector<1x8x32xf32>
    %89 = vector.shape_cast %88 : vector<1x8x32xf32> to vector<8x32xf32>
    %90 = vector.shape_cast %87 : vector<8x32xf32> to vector<1x8x32xf32>
    tpu.vector_store %arg13[%c0_64, %c0_65, %c0_66], %90 {strides = array<i32>} : memref<1x8x32xf32, #tpu.memory_space<vmem>>, vector<1x8x32xf32>,
    return
  }
  func.func @transform_0(%arg0: i32, %arg1: i32) -> (i32, i32, i32) {
    %c0_i32 = arith.constant 0 : i32
    %c0_i32_0 = arith.constant 0 : i32
    return %arg0, %arg1, %c0_i32 : i32, i32, i32
  }
  func.func @transform_1(%arg0: i32, %arg1: i32) -> (i32, i32, i32) {
    %c0_i32 = arith.constant 0 : i32
    %c0_i32_0 = arith.constant 0 : i32
    %c0_i32_1 = arith.constant 0 : i32
    return %arg0, %c0_i32, %c0_i32_0 : i32, i32, i32
  }
  func.func @transform_2(%arg0: i32, %arg1: i32) -> (i32, i32, i32) {
    %c0_i32 = arith.constant 0 : i32
    %c0_i32_0 = arith.constant 0 : i32
    %c0_i32_1 = arith.constant 0 : i32
    return %arg0, %c0_i32, %c0_i32_0 : i32, i32, i32
  }
  func.func @transform_3(%arg0: i32, %arg1: i32) -> (i32, i32) {
    %c0_i32 = arith.constant 0 : i32
    %c0_i32_0 = arith.constant 0 : i32
    %c0_i32_1 = arith.constant 0 : i32
    return %c0_i32, %c0_i32_0 : i32, i32
  }
  func.func @transform_4(%arg0: i32, %arg1: i32) -> (i32, i32) {
    %c0_i32 = arith.constant 0 : i32
    %c0_i32_0 = arith.constant 0 : i32
    %c0_i32_1 = arith.constant 0 : i32
    return %c0_i32, %c0_i32_0 : i32, i32
  }
  func.func @transform_5(%arg0: i32, %arg1: i32) -> (i32, i32) {
    %c0_i32 = arith.constant 0 : i32
    %c0_i32_0 = arith.constant 0 : i32
    %c0_i32_1 = arith.constant 0 : i32
    return %c0_i32, %c0_i32_0 : i32, i32
  }
  func.func @transform_6(%arg0: i32, %arg1: i32) -> (i32, i32) {
    %c0_i32 = arith.constant 0 : i32
    %c0_i32_0 = arith.constant 0 : i32
    %c0_i32_1 = arith.constant 0 : i32
    return %c0_i32, %c0_i32_0 : i32, i32
  }
  func.func @transform_7(%arg0: i32, %arg1: i32) -> (i32, i32) {
    %c0_i32 = arith.constant 0 : i32
    %c0_i32_0 = arith.constant 0 : i32
    %c0_i32_1 = arith.constant 0 : i32
    return %c0_i32, %c0_i32_0 : i32, i32
  }
  func.func @transform_8(%arg0: i32, %arg1: i32) -> (i32, i32) {
    %c0_i32 = arith.constant 0 : i32
    %c0_i32_0 = arith.constant 0 : i32
    %c0_i32_1 = arith.constant 0 : i32
    return %c0_i32, %c0_i32_0 : i32, i32
  }
  func.func @transform_9(%arg0: i32, %arg1: i32) -> (i32, i32) {
    %c0_i32 = arith.constant 0 : i32
    %c0_i32_0 = arith.constant 0 : i32
    %c0_i32_1 = arith.constant 0 : i32
    return %c0_i32, %c0_i32_0 : i32, i32
  }
  func.func @transform_10(%arg0: i32, %arg1: i32) -> (i32, i32) {
    %c0_i32 = arith.constant 0 : i32
    %c0_i32_0 = arith.constant 0 : i32
    %c0_i32_1 = arith.constant 0 : i32
    return %c0_i32, %c0_i32_0 : i32, i32
  }
  func.func @transform_11(%arg0: i32, %arg1: i32) -> (i32, i32, i32) {
    %c0_i32 = arith.constant 0 : i32
    %c0_i32_0 = arith.constant 0 : i32
    return %arg0, %arg1, %c0_i32 : i32, i32, i32
  }
  func.func @transform_12(%arg0: i32, %arg1: i32) -> (i32, i32, i32, i32) {
    %c0_i32 = arith.constant 0 : i32
    %c0_i32_0 = arith.constant 0 : i32
    %c0_i32_1 = arith.constant 0 : i32
    return %arg0, %c0_i32, %arg1, %c0_i32_0 : i32, i32, i32, i32
  }
}

</mosaic_0001>

<llo_original>
// kernel: tpu_custom_call.1
$region0: #{tpu_custom_call.1}
  #allocation0 [shape = 'u32[]', space=smem, size = 0x4, offset = 0x4, fixed_abs, tag = 'smem constant byte address 0x4 - core index']
  #allocation1 [shape = 'u32[144,128]{1,0:T(1,128)}', space=vmem, size = 0x12000, scoped, tag = 'internal scratch']
  #allocation2 [shape = 'f32[8,32]{1,0:T(8,128)}', space=vmem, size = 0x1000, scoped, tag = 'scratch operand']
  #allocation3 [shape = 'f32[8,32]{1,0:T(8,128)}', space=vmem, size = 0x1000, scoped, tag = 'scratch operand']
  #allocation4 [shape = 'f32[8,32]{1,0:T(8,128)}', space=vmem, size = 0x1000, scoped, tag = 'scratch operand']
  %s0 = inlined_call_operand.hbm [shape: f32[2,8,32], index: 0, kind: input, shape index: {}]
  %s1 = inlined_call_operand.hbm [shape: f32[2,8,32], index: 1, kind: input, shape index: {}]
  %s2 = inlined_call_operand.hbm [shape: f32[2,8,32], index: 2, kind: input, shape index: {}]
  %s3 = inlined_call_operand.hbm [shape: f32[32,32], index: 3, kind: input, shape index: {}]
  %s4 = inlined_call_operand.vmem [shape: f32[1,32], index: 4, kind: input, shape index: {}]
  %s5 = inlined_call_operand.hbm [shape: f32[32,32], index: 5, kind: input, shape index: {}]
  %s6 = inlined_call_operand.vmem [shape: f32[1,32], index: 6, kind: input, shape index: {}]
  %s7 = inlined_call_operand.hbm [shape: f32[32,32], index: 7, kind: input, shape index: {}]
  %s8 = inlined_call_operand.hbm [shape: f32[1,32], index: 8, kind: input, shape index: {}]
  %s9 = inlined_call_operand.vmem [shape: f32[32,32], index: 9, kind: input, shape index: {}]
  %s10 = inlined_call_operand.vmem [shape: f32[1,32], index: 10, kind: input, shape index: {}]
  %s11 = inlined_call_operand.hbm [shape: f32[2,8,32], index: 11, kind: output, shape index: {0}]
  %s12 = inlined_call_operand.hbm [shape: f32[2,4,8,8], index: 12, kind: output, shape index: {1}]
  %13 = xla_tuple %s11, %s12
  %s14 = sld [smem:[#allocation0]]
  $region117: #{tpu_custom_call.1} parent=0
    _
  %s16 = ssub.s32 1, %s14
  %s17 = scalar_select 0, %s16, %s14
  $region1: #{tpu_custom_call.1} parent=0
    #allocation5 [shape = 'u8[8192]{0}', space=vmem, size = 0x2000, scoped, tag = 'input window, operand 0']
    #allocation6 [shape = 's32[2]{0}', space=sflag, size = 0x8, scoped, tag = 'scoped memory for tpu_custom_call.1']
    #allocation7 [shape = 's32[2]{0}', space=sflag, size = 0x8, scoped, tag = 'scoped memory for tpu_custom_call.1']
    #allocation8 [shape = 'u8[8192]{0}', space=vmem, size = 0x2000, scoped, tag = 'input window, operand 1']
    #allocation9 [shape = 's32[2]{0}', space=sflag, size = 0x8, scoped, tag = 'scoped memory for tpu_custom_call.1']
    #allocation10 [shape = 'u8[8192]{0}', space=vmem, size = 0x2000, scoped, tag = 'input window, operand 2']
    #allocation11 [shape = 'u8[16384]{0}', space=vmem, size = 0x4000, scoped, tag = 'input window, operand 3, single buffered']
    #allocation12 [shape = 's32[1]{0}', space=sflag, size = 0x4, scoped, tag = 'scoped memory for tpu_custom_call.1']
    #allocation13 [shape = 'u8[16384]{0}', space=vmem, size = 0x4000, scoped, tag = 'input window, operand 5, single buffered']
    #allocation14 [shape = 'u8[16384]{0}', space=vmem, size = 0x4000, scoped, tag = 'input window, operand 7, single buffered']
    #allocation15 [shape = 's32[1]{0}', space=sflag, size = 0x4, scoped, tag = 'scoped memory for tpu_custom_call.1']
    #allocation16 [shape = 'u8[512]{0}', space=vmem, size = 0x400, scoped, tag = 'input window, operand 8, single buffered']
    #allocation17 [shape = 'u8[8192]{0}', space=vmem, size = 0x2000, scoped, tag = 'output window, operand 0']
    #allocation18 [shape = 'u8[32768]{0}', space=vmem, size = 0x8000, scoped, tag = 'output window, operand 1']
    #allocation19 [shape = 's32[2]{0}', space=sflag, size = 0x8, scoped, tag = 'scoped memory for tpu_custom_call.1']
    %18 = vsyncpa [#allocation6], 0
    %s19 = scalar_lea.sflag [#allocation6], 1
    %20 = vsyncpa %s19, 0
    %21 = vsyncpa [#allocation9], 0
    %s22 = scalar_lea.sflag [#allocation9], 1
    %23 = vsyncpa %s22, 0
    %24 = vsyncpa [#allocation12], 0
    %25 = vsyncpa [#allocation15], 0
    %26 = vsyncpa [#allocation7], 0
    %s27 = scalar_lea.sflag [#allocation7], 1
    %28 = vsyncpa %s27, 0
    %29 = vsyncpa [#allocation19], 0
    %s30 = scalar_lea.sflag [#allocation19], 1
    %31 = vsyncpa %s30, 0
    loop: start=0, step=1, limit=4
    $region2: #{tpu_custom_call.1} parent=1 // loop_pre_header
      _
    $region3: #{tpu_custom_call.1} parent=1 // loop_header
      %s33 = sphi 0, %s37
      %p34 = scmp.ge.s32.totalorder %s33, 4
      %s40 = sphi 0, %s52
      %s41 = sphi 0, %s48
      %s42 = sphi 0, %s40
      %s43 = sphi 0, %s41
      %s44 = sphi 0, %s42
      %s45 = sphi 0, %s43
      %s57 = sphi 0, %s59
      %s60 = sphi 0, %s57
      %s61 = sphi 0, %s60
      %s77 = sphi 0, %s61
      %s83 = sphi 0, %s85
      %s86 = sphi 0, %s83
      %s87 = sphi 0, %s86
      %s103 = sphi 0, %s87
      %s109 = sphi 0, %s111
      %s112 = sphi 0, %s109
      %s113 = sphi 0, %s112
      %s129 = sphi 0, %s113
      %s133 = sphi 0, %s133
      %s135 = sphi 0, %s133
      %s136 = sphi 0, %s135
      %s150 = sphi 0, %s136
      %s154 = sphi 0, %s154
      %s156 = sphi 0, %s154
      %s157 = sphi 0, %s156
      %s171 = sphi 0, %s157
      %s175 = sphi 0, %s175
      %s177 = sphi 0, %s175
      %s178 = sphi 0, %s177
      %s192 = sphi 0, %s178
      %s196 = sphi 0, %s196
      %s198 = sphi 0, %s196
      %s199 = sphi 0, %s198
      %s213 = sphi 0, %s199
      %s217 = sphi 0, %s217
      %s219 = sphi 0, %s217
      %s220 = sphi 0, %s219
      %s234 = sphi 0, %s220
      %s238 = sphi 0, %s238
      %s240 = sphi 0, %s238
      %s241 = sphi 0, %s240
      %s255 = sphi 0, %s241
      %s259 = sphi 0, %s259
      %s261 = sphi 0, %s259
      %s262 = sphi 0, %s261
      %s276 = sphi 0, %s262
      %s280 = sphi 0, %s280
      %s282 = sphi 0, %s280
      %s283 = sphi 0, %s282
      %s297 = sphi 0, %s283
      %s305 = sphi 0, %s307
      %s308 = sphi 0, %s305
      %s309 = sphi 0, %s308
      %s325 = sphi 0, %s309
      %s333 = sphi 0, %s335
      %s336 = sphi 0, %s333
      %s337 = sphi 0, %s336
      %s353 = sphi 0, %s337
    $region4: #{tpu_custom_call.1} parent=1 // loop_header_branch
      %36 = sbr.rel (%p34) target = $region8
    $region5: #{tpu_custom_call.1} parent=1 // loop_body
      %s38 = ssub.s32 %s33, 1
      %s39 = ssub.s32 %s33, 2
      %s46 = sadd.s32 1, %s41
      %p47 = scmp.ge.s32.totalorder %s46, 1
      %s48 = scalar_select %p47, 0, %s46
      %s49 = sadd.s32 1, %s40
      %s50 = scalar_select %p47, %s49, %s40
      %p51 = scmp.ge.s32.totalorder %s50, 2
      %s52 = scalar_select %p51, 0, %s50
      %s53 = ssub.s32 %s40, %s52
      %s54 = ssub.s32 %s41, %s48
      %s55 = sor.u32 %s53, %s54
      %p56 = scmp.eq.s32.totalorder %s55, 0
      %s58 = sadd.s32 %s57, 1
      %s59 = scalar_select %p56, %s57, %s58
      %p62 = pneg %p56
      %p63 = scmp.eq.s32.totalorder %s33, 1
      %p64 = por %p62, %p63
      %p65 = scmp.ne.s32.totalorder %s57, %s60
      %p66 = scmp.eq.s32.totalorder %s33, 0
      %p67 = por %p65, %p66
      %p68 = scmp.ne.s32.totalorder %s57, %s60
      %p69 = scmp.eq.s32.totalorder %s38, 1
      %p70 = por %p68, %p69
      %p71 = scmp.ne.s32.totalorder %s60, %s61
      %p72 = scmp.eq.s32.totalorder %s38, 0
      %p73 = por %p71, %p72
      %p74 = scmp.ne.s32.totalorder %s60, %s61
      %p75 = scmp.eq.s32.totalorder %s39, 1
      %p76 = por %p74, %p75
      %p78 = scmp.ne.s32.totalorder %s61, %s77
      %p79 = scmp.eq.s32.totalorder %s39, 0
      %p80 = por %p78, %p79
      %s81 = ssub.s32 %s40, %s52
      %p82 = scmp.eq.s32.totalorder %s81, 0
      %s84 = sadd.s32 %s83, 1
      %s85 = scalar_select %p82, %s83, %s84
      %p88 = pneg %p82
      %p89 = scmp.eq.s32.totalorder %s33, 1
      %p90 = por %p88, %p89
      %p91 = scmp.ne.s32.totalorder %s83, %s86
      %p92 = scmp.eq.s32.totalorder %s33, 0
      %p93 = por %p91, %p92
      %p94 = scmp.ne.s32.totalorder %s83, %s86
      %p95 = scmp.eq.s32.totalorder %s38, 1
      %p96 = por %p94, %p95
      %p97 = scmp.ne.s32.totalorder %s86, %s87
      %p98 = scmp.eq.s32.totalorder %s38, 0
      %p99 = por %p97, %p98
      %p100 = scmp.ne.s32.totalorder %s86, %s87
      %p101 = scmp.eq.s32.totalorder %s39, 1
      %p102 = por %p100, %p101
      %p104 = scmp.ne.s32.totalorder %s87, %s103
      %p105 = scmp.eq.s32.totalorder %s39, 0
      %p106 = por %p104, %p105
      %s107 = ssub.s32 %s40, %s52
      %p108 = scmp.eq.s32.totalorder %s107, 0
      %s110 = sadd.s32 %s109, 1
      %s111 = scalar_select %p108, %s109, %s110
      %p114 = pneg %p108
      %p115 = scmp.eq.s32.totalorder %s33, 1
      %p116 = por %p114, %p115
      %p117 = scmp.ne.s32.totalorder %s109, %s112
      %p118 = scmp.eq.s32.totalorder %s33, 0
      %p119 = por %p117, %p118
      %p120 = scmp.ne.s32.totalorder %s109, %s112
      %p121 = scmp.eq.s32.totalorder %s38, 1
      %p122 = por %p120, %p121
      %p123 = scmp.ne.s32.totalorder %s112, %s113
      %p124 = scmp.eq.s32.totalorder %s38, 0
      %p125 = por %p123, %p124
      %p126 = scmp.ne.s32.totalorder %s112, %s113
      %p127 = scmp.eq.s32.totalorder %s39, 1
      %p128 = por %p126, %p127
      %p130 = scmp.ne.s32.totalorder %s113, %s129
      %p131 = scmp.eq.s32.totalorder %s39, 0
      %p132 = por %p130, %p131
      %s134 = sadd.s32 %s133, 1
      %p137 = scmp.eq.s32.totalorder %s33, 1
      %p138 = scmp.ne.s32.totalorder %s133, %s135
      %p139 = scmp.eq.s32.totalorder %s33, 0
      %p140 = por %p138, %p139
      %p141 = scmp.ne.s32.totalorder %s133, %s135
      %p142 = scmp.eq.s32.totalorder %s38, 1
      %p143 = por %p141, %p142
      %p144 = scmp.ne.s32.totalorder %s135, %s136
      %p145 = scmp.eq.s32.totalorder %s38, 0
      %p146 = por %p144, %p145
      %p147 = scmp.ne.s32.totalorder %s135, %s136
      %p148 = scmp.eq.s32.totalorder %s39, 1
      %p149 = por %p147, %p148
      %p151 = scmp.ne.s32.totalorder %s136, %s150
      %p152 = scmp.eq.s32.totalorder %s39, 0
      %p153 = por %p151, %p152
      %s155 = sadd.s32 %s154, 1
      %p158 = scmp.eq.s32.totalorder %s33, 1
      %p159 = scmp.ne.s32.totalorder %s154, %s156
      %p160 = scmp.eq.s32.totalorder %s33, 0
      %p161 = por %p159, %p160
      %p162 = scmp.ne.s32.totalorder %s154, %s156
      %p163 = scmp.eq.s32.totalorder %s38, 1
      %p164 = por %p162, %p163
      %p165 = scmp.ne.s32.totalorder %s156, %s157
      %p166 = scmp.eq.s32.totalorder %s38, 0
      %p167 = por %p165, %p166
      %p168 = scmp.ne.s32.totalorder %s156, %s157
      %p169 = scmp.eq.s32.totalorder %s39, 1
      %p170 = por %p168, %p169
      %p172 = scmp.ne.s32.totalorder %s157, %s171
      %p173 = scmp.eq.s32.totalorder %s39, 0
      %p174 = por %p172, %p173
      %s176 = sadd.s32 %s175, 1
      %p179 = scmp.eq.s32.totalorder %s33, 1
      %p180 = scmp.ne.s32.totalorder %s175, %s177
      %p181 = scmp.eq.s32.totalorder %s33, 0
      %p182 = por %p180, %p181
      %p183 = scmp.ne.s32.totalorder %s175, %s177
      %p184 = scmp.eq.s32.totalorder %s38, 1
      %p185 = por %p183, %p184
      %p186 = scmp.ne.s32.totalorder %s177, %s178
      %p187 = scmp.eq.s32.totalorder %s38, 0
      %p188 = por %p186, %p187
      %p189 = scmp.ne.s32.totalorder %s177, %s178
      %p190 = scmp.eq.s32.totalorder %s39, 1
      %p191 = por %p189, %p190
      %p193 = scmp.ne.s32.totalorder %s178, %s192
      %p194 = scmp.eq.s32.totalorder %s39, 0
      %p195 = por %p193, %p194
      %s197 = sadd.s32 %s196, 1
      %p200 = scmp.eq.s32.totalorder %s33, 1
      %p201 = scmp.ne.s32.totalorder %s196, %s198
      %p202 = scmp.eq.s32.totalorder %s33, 0
      %p203 = por %p201, %p202
      %p204 = scmp.ne.s32.totalorder %s196, %s198
      %p205 = scmp.eq.s32.totalorder %s38, 1
      %p206 = por %p204, %p205
      %p207 = scmp.ne.s32.totalorder %s198, %s199
      %p208 = scmp.eq.s32.totalorder %s38, 0
      %p209 = por %p207, %p208
      %p210 = scmp.ne.s32.totalorder %s198, %s199
      %p211 = scmp.eq.s32.totalorder %s39, 1
      %p212 = por %p210, %p211
      %p214 = scmp.ne.s32.totalorder %s199, %s213
      %p215 = scmp.eq.s32.totalorder %s39, 0
      %p216 = por %p214, %p215
      %s218 = sadd.s32 %s217, 1
      %p221 = scmp.eq.s32.totalorder %s33, 1
      %p222 = scmp.ne.s32.totalorder %s217, %s219
      %p223 = scmp.eq.s32.totalorder %s33, 0
      %p224 = por %p222, %p223
      %p225 = scmp.ne.s32.totalorder %s217, %s219
      %p226 = scmp.eq.s32.totalorder %s38, 1
      %p227 = por %p225, %p226
      %p228 = scmp.ne.s32.totalorder %s219, %s220
      %p229 = scmp.eq.s32.totalorder %s38, 0
      %p230 = por %p228, %p229
      %p231 = scmp.ne.s32.totalorder %s219, %s220
      %p232 = scmp.eq.s32.totalorder %s39, 1
      %p233 = por %p231, %p232
      %p235 = scmp.ne.s32.totalorder %s220, %s234
      %p236 = scmp.eq.s32.totalorder %s39, 0
      %p237 = por %p235, %p236
      %s239 = sadd.s32 %s238, 1
      %p242 = scmp.eq.s32.totalorder %s33, 1
      %p243 = scmp.ne.s32.totalorder %s238, %s240
      %p244 = scmp.eq.s32.totalorder %s33, 0
      %p245 = por %p243, %p244
      %p246 = scmp.ne.s32.totalorder %s238, %s240
      %p247 = scmp.eq.s32.totalorder %s38, 1
      %p248 = por %p246, %p247
      %p249 = scmp.ne.s32.totalorder %s240, %s241
      %p250 = scmp.eq.s32.totalorder %s38, 0
      %p251 = por %p249, %p250
      %p252 = scmp.ne.s32.totalorder %s240, %s241
      %p253 = scmp.eq.s32.totalorder %s39, 1
      %p254 = por %p252, %p253
      %p256 = scmp.ne.s32.totalorder %s241, %s255
      %p257 = scmp.eq.s32.totalorder %s39, 0
      %p258 = por %p256, %p257
      %s260 = sadd.s32 %s259, 1
      %p263 = scmp.eq.s32.totalorder %s33, 1
      %p264 = scmp.ne.s32.totalorder %s259, %s261
      %p265 = scmp.eq.s32.totalorder %s33, 0
      %p266 = por %p264, %p265
      %p267 = scmp.ne.s32.totalorder %s259, %s261
      %p268 = scmp.eq.s32.totalorder %s38, 1
      %p269 = por %p267, %p268
      %p270 = scmp.ne.s32.totalorder %s261, %s262
      %p271 = scmp.eq.s32.totalorder %s38, 0
      %p272 = por %p270, %p271
      %p273 = scmp.ne.s32.totalorder %s261, %s262
      %p274 = scmp.eq.s32.totalorder %s39, 1
      %p275 = por %p273, %p274
      %p277 = scmp.ne.s32.totalorder %s262, %s276
      %p278 = scmp.eq.s32.totalorder %s39, 0
      %p279 = por %p277, %p278
      %s281 = sadd.s32 %s280, 1
      %p284 = scmp.eq.s32.totalorder %s33, 1
      %p285 = scmp.ne.s32.totalorder %s280, %s282
      %p286 = scmp.eq.s32.totalorder %s33, 0
      %p287 = por %p285, %p286
      %p288 = scmp.ne.s32.totalorder %s280, %s282
      %p289 = scmp.eq.s32.totalorder %s38, 1
      %p290 = por %p288, %p289
      %p291 = scmp.ne.s32.totalorder %s282, %s283
      %p292 = scmp.eq.s32.totalorder %s38, 0
      %p293 = por %p291, %p292
      %p294 = scmp.ne.s32.totalorder %s282, %s283
      %p295 = scmp.eq.s32.totalorder %s39, 1
      %p296 = por %p294, %p295
      %p298 = scmp.ne.s32.totalorder %s283, %s297
      %p299 = scmp.eq.s32.totalorder %s39, 0
      %p300 = por %p298, %p299
      %s301 = ssub.s32 %s40, %s52
      %s302 = ssub.s32 %s41, %s48
      %s303 = sor.u32 %s301, %s302
      %p304 = scmp.eq.s32.totalorder %s303, 0
      %s306 = sadd.s32 %s305, 1
      %s307 = scalar_select %p304, %s305, %s306
      %p310 = pneg %p304
      %p311 = scmp.eq.s32.totalorder %s33, 1
      %p312 = por %p310, %p311
      %p313 = scmp.ne.s32.totalorder %s305, %s308
      %p314 = scmp.eq.s32.totalorder %s33, 0
      %p315 = por %p313, %p314
      %p316 = scmp.ne.s32.totalorder %s305, %s308
      %p317 = scmp.eq.s32.totalorder %s38, 1
      %p318 = por %p316, %p317
      %p319 = scmp.ne.s32.totalorder %s308, %s309
      %p320 = scmp.eq.s32.totalorder %s38, 0
      %p321 = por %p319, %p320
      %p322 = scmp.ne.s32.totalorder %s308, %s309
      %p323 = scmp.eq.s32.totalorder %s39, 1
      %p324 = por %p322, %p323
      %p326 = scmp.ne.s32.totalorder %s309, %s325
      %p327 = scmp.eq.s32.totalorder %s39, 0
      %p328 = por %p326, %p327
      %s329 = ssub.s32 %s40, %s52
      %s330 = ssub.s32 %s41, %s48
      %s331 = sor.u32 %s329, %s330
      %p332 = scmp.eq.s32.totalorder %s331, 0
      %s334 = sadd.s32 %s333, 1
      %s335 = scalar_select %p332, %s333, %s334
      %p338 = pneg %p332
      %p339 = scmp.eq.s32.totalorder %s33, 1
      %p340 = por %p338, %p339
      %p341 = scmp.ne.s32.totalorder %s333, %s336
      %p342 = scmp.eq.s32.totalorder %s33, 0
      %p343 = por %p341, %p342
      %p344 = scmp.ne.s32.totalorder %s333, %s336
      %p345 = scmp.eq.s32.totalorder %s38, 1
      %p346 = por %p344, %p345
      %p347 = scmp.ne.s32.totalorder %s336, %s337
      %p348 = scmp.eq.s32.totalorder %s38, 0
      %p349 = por %p347, %p348
      %p350 = scmp.ne.s32.totalorder %s336, %s337
      %p351 = scmp.eq.s32.totalorder %s39, 1
      %p352 = por %p350, %p351
      %p354 = scmp.ne.s32.totalorder %s337, %s353
      %p355 = scmp.eq.s32.totalorder %s39, 0
      %p356 = por %p354, %p355
      %p357 = scmp.le.s32.totalorder 1, %s33
      %p358 = scmp.lt.s32.totalorder %s33, 3
      %p359 = pnand %p357, %p358
      %p360 = pneg %p359
      // Predicated region
      $region9: #{tpu_custom_call.1} parent=5 // pred_check
        _
      $region10: #{tpu_custom_call.1} parent=5 // pred_check_branch
        %362 = sbr.rel (%p359) target = $region12
      $region11: #{tpu_custom_call.1} parent=5 // pred_region
        %s363 = ssub.s32 %s33, 1
        // Predicated region
        $region13: #{tpu_custom_call.1} parent=11 // pred_check
          %p364 = pneg %p146
        $region14: #{tpu_custom_call.1} parent=11 // pred_check_branch
          %366 = sbr.rel (%p364) target = $region16
        $region15: #{tpu_custom_call.1} parent=11 // pred_region
          %s368 = ssub.s32 512, 512
          %369 = vsyncadd [#allocation12], %s368
          %s370 = sshll.u32 [#allocation11], 4
          %s371 = int_to_ptr.vmem [resolvable:$true] %s370
          %376 = dma.hbm_to_vmem [thread:$0]  %s3, 512, %s371, [#allocation12], 128, 128, 8
        $region16: #{tpu_custom_call.1} parent=11 // pred_fallthru
          _
        // Predicated region
        $region17: #{tpu_custom_call.1} parent=11 // pred_check
          %p377 = pneg %p167
        $region18: #{tpu_custom_call.1} parent=11 // pred_check_branch
          %379 = sbr.rel (%p377) target = $region20
        $region19: #{tpu_custom_call.1} parent=11 // pred_region
          _
        $region20: #{tpu_custom_call.1} parent=11 // pred_fallthru
          _
        // Predicated region
        $region21: #{tpu_custom_call.1} parent=11 // pred_check
          %p380 = pneg %p188
        $region22: #{tpu_custom_call.1} parent=11 // pred_check_branch
          %382 = sbr.rel (%p380) target = $region24
        $region23: #{tpu_custom_call.1} parent=11 // pred_region
          %s384 = ssub.s32 512, 512
          %385 = vsyncadd [#allocation12], %s384
          %s386 = sshll.u32 [#allocation13], 4
          %s387 = int_to_ptr.vmem [resolvable:$true] %s386
          %392 = dma.hbm_to_vmem [thread:$0]  %s5, 512, %s387, [#allocation12], 128, 128, 8
        $region24: #{tpu_custom_call.1} parent=11 // pred_fallthru
          _
        // Predicated region
        $region25: #{tpu_custom_call.1} parent=11 // pred_check
          %p393 = pneg %p209
        $region26: #{tpu_custom_call.1} parent=11 // pred_check_branch
          %395 = sbr.rel (%p393) target = $region28
        $region27: #{tpu_custom_call.1} parent=11 // pred_region
          _
        $region28: #{tpu_custom_call.1} parent=11 // pred_fallthru
          _
        // Predicated region
        $region29: #{tpu_custom_call.1} parent=11 // pred_check
          %p396 = pneg %p230
        $region30: #{tpu_custom_call.1} parent=11 // pred_check_branch
          %398 = sbr.rel (%p396) target = $region32
        $region31: #{tpu_custom_call.1} parent=11 // pred_region
          %s400 = ssub.s32 512, 512
          %401 = vsyncadd [#allocation15], %s400
          %s402 = sshll.u32 [#allocation14], 4
          %s403 = int_to_ptr.vmem [resolvable:$true] %s402
          %408 = dma.hbm_to_vmem [thread:$0]  %s7, 512, %s403, [#allocation15], 128, 128, 8
        $region32: #{tpu_custom_call.1} parent=11 // pred_fallthru
          _
        // Predicated region
        $region33: #{tpu_custom_call.1} parent=11 // pred_check
          %p409 = pneg %p251
        $region34: #{tpu_custom_call.1} parent=11 // pred_check_branch
          %411 = sbr.rel (%p409) target = $region36
        $region35: #{tpu_custom_call.1} parent=11 // pred_region
          %s413 = ssub.s32 16, 16
          %414 = vsyncadd [#allocation15], %s413
          %s416 = sshll.u32 [#allocation16], 4
          %s417 = int_to_ptr.vmem [resolvable:$true] %s416
          %419 = dma.hbm_to_vmem [thread:$0]  %s8, 16, %s417, [#allocation15]
        $region36: #{tpu_custom_call.1} parent=11 // pred_fallthru
          _
        // Predicated region
        $region37: #{tpu_custom_call.1} parent=11 // pred_check
          %p420 = pneg %p272
        $region38: #{tpu_custom_call.1} parent=11 // pred_check_branch
          %422 = sbr.rel (%p420) target = $region40
        $region39: #{tpu_custom_call.1} parent=11 // pred_region
          _
        $region40: #{tpu_custom_call.1} parent=11 // pred_fallthru
          _
        // Predicated region
        $region41: #{tpu_custom_call.1} parent=11 // pred_check
          %p423 = pneg %p293
        $region42: #{tpu_custom_call.1} parent=11 // pred_check_branch
          %425 = sbr.rel (%p423) target = $region44
        $region43: #{tpu_custom_call.1} parent=11 // pred_region
          _
        $region44: #{tpu_custom_call.1} parent=11 // pred_fallthru
          _
      $region12: #{tpu_custom_call.1} parent=5 // pred_fallthru
        _
      %p426 = scmp.lt.s32.totalorder %s33, 2
      // Predicated region
      $region45: #{tpu_custom_call.1} parent=5 // pred_check
        %p427 = pneg %p426
      $region46: #{tpu_custom_call.1} parent=5 // pred_check_branch
        %429 = sbr.rel (%p427) target = $region48
      $region47: #{tpu_custom_call.1} parent=5 // pred_region
        // Predicated region
        $region49: #{tpu_custom_call.1} parent=47 // pred_check
          %p430 = pneg %p67
        $region50: #{tpu_custom_call.1} parent=47 // pred_check_branch
          %432 = sbr.rel (%p430) target = $region52
        $region51: #{tpu_custom_call.1} parent=47 // pred_region
          %s433 = sand.u32 %s57, 1
          %s434 = scalar_lea.sflag [#allocation6], %s433
          %s435 = sand.u32 %s57, 1
          %s436 = smul.addr %s435, 8
          %s437 = scalar_lea.vmem [#allocation5], %s436
          %s439 = ssub.s32 128, 128
          %440 = vsyncadd %s434, %s439
          %s441 = sadd.s32 %s41, %s40
          %s442 = smul.addr %s441, 128
          %s443 = scalar_lea.hbm %s0, %s442
          %s445 = sshll.u32 %s437, 4
          %s446 = int_to_ptr.vmem [resolvable:$true] %s445
          %448 = dma.hbm_to_vmem [thread:$0]  %s443, 128, %s446, %s434
        $region52: #{tpu_custom_call.1} parent=47 // pred_fallthru
          _
        // Predicated region
        $region53: #{tpu_custom_call.1} parent=47 // pred_check
          %p449 = pneg %p93
        $region54: #{tpu_custom_call.1} parent=47 // pred_check_branch
          %451 = sbr.rel (%p449) target = $region56
        $region55: #{tpu_custom_call.1} parent=47 // pred_region
          %s452 = sand.u32 %s33, 1
          %s453 = scalar_lea.sflag [#allocation9], %s452
          %s454 = sand.u32 %s83, 1
          %s455 = smul.addr %s454, 8
          %s456 = scalar_lea.vmem [#allocation8], %s455
          %s458 = ssub.s32 128, 128
          %459 = vsyncadd %s453, %s458
          %s460 = smul.addr %s40, 128
          %s461 = scalar_lea.hbm %s1, %s460
          %s463 = sshll.u32 %s456, 4
          %s464 = int_to_ptr.vmem [resolvable:$true] %s463
          %466 = dma.hbm_to_vmem [thread:$0]  %s461, 128, %s464, %s453
        $region56: #{tpu_custom_call.1} parent=47 // pred_fallthru
          _
        // Predicated region
        $region57: #{tpu_custom_call.1} parent=47 // pred_check
          %p467 = pneg %p119
        $region58: #{tpu_custom_call.1} parent=47 // pred_check_branch
          %469 = sbr.rel (%p467) target = $region60
        $region59: #{tpu_custom_call.1} parent=47 // pred_region
          %s470 = sand.u32 %s33, 1
          %s471 = scalar_lea.sflag [#allocation9], %s470
          %s472 = sand.u32 %s109, 1
          %s473 = smul.addr %s472, 8
          %s474 = scalar_lea.vmem [#allocation10], %s473
          %s476 = ssub.s32 128, 128
          %477 = vsyncadd %s471, %s476
          %s478 = smul.addr %s40, 128
          %s479 = scalar_lea.hbm %s2, %s478
          %s481 = sshll.u32 %s474, 4
          %s482 = int_to_ptr.vmem [resolvable:$true] %s481
          %484 = dma.hbm_to_vmem [thread:$0]  %s479, 128, %s482, %s471
        $region60: #{tpu_custom_call.1} parent=47 // pred_fallthru
          _
      $region48: #{tpu_custom_call.1} parent=5 // pred_fallthru
        _
      %p485 = scmp.le.s32.totalorder 1, %s33
      %p486 = scmp.lt.s32.totalorder %s33, 3
      %p487 = pnand %p485, %p486
      %p488 = pneg %p487
      // Predicated region
      $region61: #{tpu_custom_call.1} parent=5 // pred_check
        _
      $region62: #{tpu_custom_call.1} parent=5 // pred_check_branch
        %490 = sbr.rel (%p487) target = $region64
      $region63: #{tpu_custom_call.1} parent=5 // pred_region
        %s491 = ssub.s32 %s33, 1
        %s492 = sand.u32 %s60, 1
        %s493 = scalar_lea.sflag [#allocation6], %s492
        %s494 = sand.u32 %s60, 1
        %s495 = smul.addr %s494, 8
        %s496 = scalar_lea.vmem [#allocation5], %s495
        // Predicated region
        $region65: #{tpu_custom_call.1} parent=63 // pred_check
          %p497 = pneg %p73
        $region66: #{tpu_custom_call.1} parent=63 // pred_check_branch
          %499 = sbr.rel (%p497) target = $region68
        $region67: #{tpu_custom_call.1} parent=63 // pred_region
          %500 = dma.done %s493, 128
        $region68: #{tpu_custom_call.1} parent=63 // pred_fallthru
          _
        %s501 = sand.u32 %s38, 1
        %s502 = scalar_lea.sflag [#allocation9], %s501
        %s503 = sand.u32 %s86, 1
        %s504 = smul.addr %s503, 8
        %s505 = scalar_lea.vmem [#allocation8], %s504
        // Predicated region
        $region69: #{tpu_custom_call.1} parent=63 // pred_check
          %p506 = pneg %p99
        $region70: #{tpu_custom_call.1} parent=63 // pred_check_branch
          %508 = sbr.rel (%p506) target = $region72
        $region71: #{tpu_custom_call.1} parent=63 // pred_region
          %509 = dma.done %s502, 128
        $region72: #{tpu_custom_call.1} parent=63 // pred_fallthru
          _
        %s510 = sand.u32 %s38, 1
        %s511 = scalar_lea.sflag [#allocation9], %s510
        %s512 = sand.u32 %s112, 1
        %s513 = smul.addr %s512, 8
        %s514 = scalar_lea.vmem [#allocation10], %s513
        // Predicated region
        $region73: #{tpu_custom_call.1} parent=63 // pred_check
          %p515 = pneg %p125
        $region74: #{tpu_custom_call.1} parent=63 // pred_check_branch
          %517 = sbr.rel (%p515) target = $region76
        $region75: #{tpu_custom_call.1} parent=63 // pred_region
          %518 = dma.done %s511, 128
        $region76: #{tpu_custom_call.1} parent=63 // pred_fallthru
          _
        // Predicated region
        $region77: #{tpu_custom_call.1} parent=63 // pred_check
          %p519 = pneg %p146
        $region78: #{tpu_custom_call.1} parent=63 // pred_check_branch
          %521 = sbr.rel (%p519) target = $region80
        $region79: #{tpu_custom_call.1} parent=63 // pred_region
          %522 = dma.done [#allocation12], 512
        $region80: #{tpu_custom_call.1} parent=63 // pred_fallthru
          _
        // Predicated region
        $region81: #{tpu_custom_call.1} parent=63 // pred_check
          %p523 = pneg %p188
        $region82: #{tpu_custom_call.1} parent=63 // pred_check_branch
          %525 = sbr.rel (%p523) target = $region84
        $region83: #{tpu_custom_call.1} parent=63 // pred_region
          %526 = dma.done [#allocation12], 512
        $region84: #{tpu_custom_call.1} parent=63 // pred_fallthru
          _
        // Predicated region
        $region85: #{tpu_custom_call.1} parent=63 // pred_check
          %p527 = pneg %p230
        $region86: #{tpu_custom_call.1} parent=63 // pred_check_branch
          %529 = sbr.rel (%p527) target = $region88
        $region87: #{tpu_custom_call.1} parent=63 // pred_region
          %530 = dma.done [#allocation15], 512
        $region88: #{tpu_custom_call.1} parent=63 // pred_fallthru
          _
        // Predicated region
        $region89: #{tpu_custom_call.1} parent=63 // pred_check
          %p531 = pneg %p251
        $region90: #{tpu_custom_call.1} parent=63 // pred_check_branch
          %533 = sbr.rel (%p531) target = $region92
        $region91: #{tpu_custom_call.1} parent=63 // pred_region
          %534 = dma.done [#allocation15], 16
        $region92: #{tpu_custom_call.1} parent=63 // pred_fallthru
          _
        %s535 = sand.u32 %s60, 1
        %s536 = scalar_lea.sflag [#allocation6], %s535
        %s537 = sand.u32 %s60, 1
        %s538 = smul.addr %s537, 8
        %s539 = scalar_lea.vmem [#allocation5], %s538
        %p540 = pneg %p73
        %p541 = pneg %p70
        %s542 = sand.u32 %s38, 1
        %s543 = scalar_lea.sflag [#allocation9], %s542
        %s544 = sand.u32 %s86, 1
        %s545 = smul.addr %s544, 8
        %s546 = scalar_lea.vmem [#allocation8], %s545
        %p547 = pneg %p99
        %p548 = pneg %p96
        %s549 = sand.u32 %s38, 1
        %s550 = scalar_lea.sflag [#allocation9], %s549
        %s551 = sand.u32 %s112, 1
        %s552 = smul.addr %s551, 8
        %s553 = scalar_lea.vmem [#allocation10], %s552
        %p554 = pneg %p125
        %p555 = pneg %p122
        %p556 = pneg %p146
        %p557 = pneg %p143
        %p558 = pneg %p167
        %p559 = pneg %p164
        %p560 = pneg %p188
        %p561 = pneg %p185
        %p562 = pneg %p209
        %p563 = pneg %p206
        %p564 = pneg %p230
        %p565 = pneg %p227
        %p566 = pneg %p251
        %p567 = pneg %p248
        %p568 = pneg %p272
        %p569 = pneg %p269
        %p570 = pneg %p293
        %p571 = pneg %p290
        %p572 = pneg %p321
        %p573 = pneg %p318
        %s574 = sand.u32 %s308, 1
        %s575 = scalar_lea.sflag [#allocation7], %s574
        %s576 = sand.u32 %s308, 1
        %s577 = smul.addr %s576, 8
        %s578 = scalar_lea.vmem [#allocation17], %s577
        %p579 = pneg %p349
        %p580 = pneg %p346
        %s581 = sand.u32 %s336, 1
        %s582 = scalar_lea.sflag [#allocation19], %s581
        %s583 = sand.u32 %s336, 1
        %s584 = smul.addr %s583, 32
        %s585 = scalar_lea.vmem [#allocation18], %s584
        %p586 = scmp.eq.s32.totalorder %s43, 0
        // Predicated region
        $region93: #{tpu_custom_call.1} parent=63 // pred_check
          %p587 = pneg %p586
        $region94: #{tpu_custom_call.1} parent=63 // pred_check_branch
          %589 = sbr.rel (%p587) target = $region96
        $region95: #{tpu_custom_call.1} parent=63 // pred_region
          %v590 = vld [vmem:[%s505] sm:$0xff]
          %v591 = vld [vmem:[#allocation13] sm:$0xff]
          %v592 = vld [vmem:[#allocation13 + $0x8] sm:$0xff]
          %v593 = vld [vmem:[#allocation13 + $0x10] sm:$0xff]
          %v594 = vld [vmem:[#allocation13 + $0x18] sm:$0xff]
          %v595 = vld [vmem:[%s6] sm:$0x1]
          %v597 = vlaneseq
          %v598 = vshrl.u32 %v597, 7
          %v599 = vsub.s32 0, %v598
          %v600 = vrot.slane %v595, %v599
          %vm602 = vcmask 261120
          %v604 = vsel %vm602, %v590, 0
          %606 = vmatprep.subr.mxu0 0.0
          %607 = vmatpush1.msra.mxu0 %v591
          %608 = vmatprep.subr.mxu0 0.0
          %609 = vmatpush1.msra.mxu0 %v592
          %610 = vmatprep.subr.mxu0 0.0
          %611 = vmatpush1.msra.mxu0 %v593
          %612 = vmatprep.subr.mxu0 0.0
          %613 = vmatpush1.msra.mxu0 %v594
          %614 = vmatprep.subr.mxu0 0.0
          %615 = vmatpush1.msra.mxu0 0.0
          %616 = vmatprep.subr.mxu0 0.0
          %617 = vmatpush1.msra.mxu0 0.0
          %618 = vmatprep.subr.mxu0 0.0
          %619 = vmatpush1.msra.mxu0 0.0
          %620 = vmatprep.subr.mxu0 0.0
          %621 = vmatpush1.msra.mxu0 0.0
          %622 = vmatprep.subr.mxu0 0.0
          %623 = vmatpush1.msra.mxu0 0.0
          %624 = vmatprep.subr.mxu0 0.0
          %625 = vmatpush1.msra.mxu0 0.0
          %626 = vmatprep.subr.mxu0 0.0
          %627 = vmatpush1.msra.mxu0 0.0
          %628 = vmatprep.subr.mxu0 0.0
          %629 = vmatpush1.msra.mxu0 0.0
          %630 = vmatprep.subr.mxu0 0.0
          %631 = vmatpush1.msra.mxu0 0.0
          %632 = vmatprep.subr.mxu0 0.0
          %633 = vmatpush1.msra.mxu0 0.0
          %634 = vmatprep.subr.mxu0 0.0
          %635 = vmatpush1.msra.mxu0 0.0
          %636 = vmatprep.subr.mxu0 0.0
          %637 = vmatpush1.msra.mxu0 0.0
          %638 = vmatprep.subr.mxu0 0.0
          %639 = vmatpush1.msra.mxu0 0.0
          %640 = vmatprep.subr.mxu0 0.0
          %641 = vmatpush1.msra.mxu0 0.0
          %642 = vmatprep.subr.mxu0 0.0
          %643 = vmatpush1.msra.mxu0 0.0
          %644 = vmatprep.subr.mxu0 0.0
          %645 = vmatpush1.msra.mxu0 0.0
          %646 = vmatprep.subr.mxu0 0.0
          %647 = vmatpush1.msra.mxu0 0.0
          %648 = vmatprep.subr.mxu0 0.0
          %649 = vmatpush1.msra.mxu0 0.0
          %650 = vmatprep.subr.mxu0 0.0
          %651 = vmatpush1.msra.mxu0 0.0
          %652 = vmatprep.subr.mxu0 0.0
          %653 = vmatpush1.msra.mxu0 0.0
          %654 = vmatprep.subr.mxu0 0.0
          %655 = vmatpush1.msra.mxu0 0.0
          %656 = vmatprep.subr.mxu0 0.0
          %657 = vmatpush1.msra.mxu0 0.0
          %658 = vmatprep.subr.mxu0 0.0
          %659 = vmatpush1.msra.mxu0 0.0
          %660 = vmatprep.subr.mxu0 0.0
          %661 = vmatpush1.msra.mxu0 0.0
          %662 = vmatprep.subr.mxu0 0.0
          %663 = vmatpush1.msra.mxu0 0.0
          %664 = vmatprep.subr.mxu0 0.0
          %665 = vmatpush1.msra.mxu0 0.0
          %666 = vmatprep.subr.mxu0 0.0
          %667 = vmatpush1.msra.mxu0 0.0
          %668 = vmatprep.subr.mxu0 0.0
          %669 = vmatpush1.msra.mxu0 0.0
          %670 = vmatprep.mubr.f32.mxu0 0.0
          %671 = vmatmul.mubr.f32.gmra.mrb[0].mxu0 %v604
          %v672 = vpop.f32.mrb[0].mxu0
          %v673 = vadd.f32 %v600, %v672
          %v674 = vpop.f32.mrb[0].mxu0
          %675 = vdwg.mxu0
          %v676 = vld [vmem:[%s514] sm:$0xff]
          %v677 = vld [vmem:[#allocation14] sm:$0xff]
          %v678 = vld [vmem:[#allocation14 + $0x8] sm:$0xff]
          %v679 = vld [vmem:[#allocation14 + $0x10] sm:$0xff]
          %v680 = vld [vmem:[#allocation14 + $0x18] sm:$0xff]
          %v681 = vld [vmem:[#allocation16] sm:$0x1]
          %v683 = vlaneseq
          %v684 = vshrl.u32 %v683, 7
          %v685 = vsub.s32 0, %v684
          %v686 = vrot.slane %v681, %v685
          %v689 = vsel %vm602, %v676, 0
          %691 = vmatprep.subr.mxu0 0.0
          %692 = vmatpush1.msra.mxu0 %v677
          %693 = vmatprep.subr.mxu0 0.0
          %694 = vmatpush1.msra.mxu0 %v678
          %695 = vmatprep.subr.mxu0 0.0
          %696 = vmatpush1.msra.mxu0 %v679
          %697 = vmatprep.subr.mxu0 0.0
          %698 = vmatpush1.msra.mxu0 %v680
          %699 = vmatprep.subr.mxu0 0.0
          %700 = vmatpush1.msra.mxu0 0.0
          %701 = vmatprep.subr.mxu0 0.0
          %702 = vmatpush1.msra.mxu0 0.0
          %703 = vmatprep.subr.mxu0 0.0
          %704 = vmatpush1.msra.mxu0 0.0
          %705 = vmatprep.subr.mxu0 0.0
          %706 = vmatpush1.msra.mxu0 0.0
          %707 = vmatprep.subr.mxu0 0.0
          %708 = vmatpush1.msra.mxu0 0.0
          %709 = vmatprep.subr.mxu0 0.0
          %710 = vmatpush1.msra.mxu0 0.0
          %711 = vmatprep.subr.mxu0 0.0
          %712 = vmatpush1.msra.mxu0 0.0
          %713 = vmatprep.subr.mxu0 0.0
          %714 = vmatpush1.msra.mxu0 0.0
          %715 = vmatprep.subr.mxu0 0.0
          %716 = vmatpush1.msra.mxu0 0.0
          %717 = vmatprep.subr.mxu0 0.0
          %718 = vmatpush1.msra.mxu0 0.0
          %719 = vmatprep.subr.mxu0 0.0
          %720 = vmatpush1.msra.mxu0 0.0
          %721 = vmatprep.subr.mxu0 0.0
          %722 = vmatpush1.msra.mxu0 0.0
          %723 = vmatprep.subr.mxu0 0.0
          %724 = vmatpush1.msra.mxu0 0.0
          %725 = vmatprep.subr.mxu0 0.0
          %726 = vmatpush1.msra.mxu0 0.0
          %727 = vmatprep.subr.mxu0 0.0
          %728 = vmatpush1.msra.mxu0 0.0
          %729 = vmatprep.subr.mxu0 0.0
          %730 = vmatpush1.msra.mxu0 0.0
          %731 = vmatprep.subr.mxu0 0.0
          %732 = vmatpush1.msra.mxu0 0.0
          %733 = vmatprep.subr.mxu0 0.0
          %734 = vmatpush1.msra.mxu0 0.0
          %735 = vmatprep.subr.mxu0 0.0
          %736 = vmatpush1.msra.mxu0 0.0
          %737 = vmatprep.subr.mxu0 0.0
          %738 = vmatpush1.msra.mxu0 0.0
          %739 = vmatprep.subr.mxu0 0.0
          %740 = vmatpush1.msra.mxu0 0.0
          %741 = vmatprep.subr.mxu0 0.0
          %742 = vmatpush1.msra.mxu0 0.0
          %743 = vmatprep.subr.mxu0 0.0
          %744 = vmatpush1.msra.mxu0 0.0
          %745 = vmatprep.subr.mxu0 0.0
          %746 = vmatpush1.msra.mxu0 0.0
          %747 = vmatprep.subr.mxu0 0.0
          %748 = vmatpush1.msra.mxu0 0.0
          %749 = vmatprep.subr.mxu0 0.0
          %750 = vmatpush1.msra.mxu0 0.0
          %751 = vmatprep.subr.mxu0 0.0
          %752 = vmatpush1.msra.mxu0 0.0
          %753 = vmatprep.subr.mxu0 0.0
          %754 = vmatpush1.msra.mxu0 0.0
          %755 = vmatprep.mubr.f32.mxu0 0.0
          %756 = vmatmul.mubr.f32.gmra.mrb[0].mxu0 %v689
          %v757 = vpop.f32.mrb[0].mxu0
          %v758 = vadd.f32 %v686, %v757
          %v759 = vpop.f32.mrb[0].mxu0
          %760 = vdwg.mxu0
          %761 = vst.msk [vmem:[#allocation2] sm:$0xff] %vm602, %v673
          %762 = vst.msk [vmem:[#allocation3] sm:$0xff] %vm602, %v758
        $region96: #{tpu_custom_call.1} parent=63 // pred_fallthru
          _
        %v763 = vld [vmem:[%s496] sm:$0xff]
        %v764 = vld [vmem:[#allocation11] sm:$0xff]
        %v765 = vld [vmem:[#allocation11 + $0x8] sm:$0xff]
        %v766 = vld [vmem:[#allocation11 + $0x10] sm:$0xff]
        %v767 = vld [vmem:[#allocation11 + $0x18] sm:$0xff]
        %v768 = vld [vmem:[%s4] sm:$0x1]
        %v770 = vlaneseq
        %v771 = vshrl.u32 %v770, 7
        %v772 = vsub.s32 0, %v771
        %v773 = vrot.slane %v768, %v772
        %vm775 = vcmask 261120
        %v777 = vsel %vm775, %v763, 0
        %779 = vmatprep.subr.mxu0 0.0
        %780 = vmatpush1.msra.mxu0 %v764
        %781 = vmatprep.subr.mxu0 0.0
        %782 = vmatpush1.msra.mxu0 %v765
        %783 = vmatprep.subr.mxu0 0.0
        %784 = vmatpush1.msra.mxu0 %v766
        %785 = vmatprep.subr.mxu0 0.0
        %786 = vmatpush1.msra.mxu0 %v767
        %787 = vmatprep.subr.mxu0 0.0
        %788 = vmatpush1.msra.mxu0 0.0
        %789 = vmatprep.subr.mxu0 0.0
        %790 = vmatpush1.msra.mxu0 0.0
        %791 = vmatprep.subr.mxu0 0.0
        %792 = vmatpush1.msra.mxu0 0.0
        %793 = vmatprep.subr.mxu0 0.0
        %794 = vmatpush1.msra.mxu0 0.0
        %795 = vmatprep.subr.mxu0 0.0
        %796 = vmatpush1.msra.mxu0 0.0
        %797 = vmatprep.subr.mxu0 0.0
        %798 = vmatpush1.msra.mxu0 0.0
        %799 = vmatprep.subr.mxu0 0.0
        %800 = vmatpush1.msra.mxu0 0.0
        %801 = vmatprep.subr.mxu0 0.0
        %802 = vmatpush1.msra.mxu0 0.0
        %803 = vmatprep.subr.mxu0 0.0
        %804 = vmatpush1.msra.mxu0 0.0
        %805 = vmatprep.subr.mxu0 0.0
        %806 = vmatpush1.msra.mxu0 0.0
        %807 = vmatprep.subr.mxu0 0.0
        %808 = vmatpush1.msra.mxu0 0.0
        %809 = vmatprep.subr.mxu0 0.0
        %810 = vmatpush1.msra.mxu0 0.0
        %811 = vmatprep.subr.mxu0 0.0
        %812 = vmatpush1.msra.mxu0 0.0
        %813 = vmatprep.subr.mxu0 0.0
        %814 = vmatpush1.msra.mxu0 0.0
        %815 = vmatprep.subr.mxu0 0.0
        %816 = vmatpush1.msra.mxu0 0.0
        %817 = vmatprep.subr.mxu0 0.0
        %818 = vmatpush1.msra.mxu0 0.0
        %819 = vmatprep.subr.mxu0 0.0
        %820 = vmatpush1.msra.mxu0 0.0
        %821 = vmatprep.subr.mxu0 0.0
        %822 = vmatpush1.msra.mxu0 0.0
        %823 = vmatprep.subr.mxu0 0.0
        %824 = vmatpush1.msra.mxu0 0.0
        %825 = vmatprep.subr.mxu0 0.0
        %826 = vmatpush1.msra.mxu0 0.0
        %827 = vmatprep.subr.mxu0 0.0
        %828 = vmatpush1.msra.mxu0 0.0
        %829 = vmatprep.subr.mxu0 0.0
        %830 = vmatpush1.msra.mxu0 0.0
        %831 = vmatprep.subr.mxu0 0.0
        %832 = vmatpush1.msra.mxu0 0.0
        %833 = vmatprep.subr.mxu0 0.0
        %834 = vmatpush1.msra.mxu0 0.0
        %835 = vmatprep.subr.mxu0 0.0
        %836 = vmatpush1.msra.mxu0 0.0
        %837 = vmatprep.subr.mxu0 0.0
        %838 = vmatpush1.msra.mxu0 0.0
        %839 = vmatprep.subr.mxu0 0.0
        %840 = vmatpush1.msra.mxu0 0.0
        %841 = vmatprep.subr.mxu0 0.0
        %842 = vmatpush1.msra.mxu0 0.0
        %843 = vmatprep.mubr.f32.mxu0 0.0
        %844 = vmatmul.mubr.f32.gmra.mrb[0].mxu0 %v777
        %v845 = vpop.f32.mrb[0].mxu0
        %v846 = vadd.f32 %v773, %v845
        %v847 = vpop.f32.mrb[0].mxu0
        %848 = vdwg.mxu0
        %v849 = vld [vmem:[#allocation2] sm:$0xff]
        %v850 = vld [vmem:[#allocation3] sm:$0xff]
        %vm851 = vcmask 64512
        %v853 = vsel %vm851, %v846, 0
        %v856 = vsel %vm851, %v849, 0
        %858 = vmatprep.subr.mxu0 0.0
        %859 = vmatpush1.xpose.msra.mxu0 %v856
        %860 = vmatprep.subr.mxu0 0.0
        %861 = vmatpush1.xpose.msra.mxu0 0.0
        %862 = vmatprep.subr.mxu0 0.0
        %863 = vmatpush1.xpose.msra.mxu0 0.0
        %864 = vmatprep.subr.mxu0 0.0
        %865 = vmatpush1.xpose.msra.mxu0 0.0
        %866 = vmatprep.subr.mxu0 0.0
        %867 = vmatpush1.xpose.msra.mxu0 0.0
        %868 = vmatprep.subr.mxu0 0.0
        %869 = vmatpush1.xpose.msra.mxu0 0.0
        %870 = vmatprep.subr.mxu0 0.0
        %871 = vmatpush1.xpose.msra.mxu0 0.0
        %872 = vmatprep.subr.mxu0 0.0
        %873 = vmatpush1.xpose.msra.mxu0 0.0
        %874 = vmatprep.subr.mxu0 0.0
        %875 = vmatpush1.xpose.msra.mxu0 0.0
        %876 = vmatprep.subr.mxu0 0.0
        %877 = vmatpush1.xpose.msra.mxu0 0.0
        %878 = vmatprep.subr.mxu0 0.0
        %879 = vmatpush1.xpose.msra.mxu0 0.0
        %880 = vmatprep.subr.mxu0 0.0
        %881 = vmatpush1.xpose.msra.mxu0 0.0
        %882 = vmatprep.subr.mxu0 0.0
        %883 = vmatpush1.xpose.msra.mxu0 0.0
        %884 = vmatprep.subr.mxu0 0.0
        %885 = vmatpush1.xpose.msra.mxu0 0.0
        %886 = vmatprep.subr.mxu0 0.0
        %887 = vmatpush1.xpose.msra.mxu0 0.0
        %888 = vmatprep.subr.mxu0 0.0
        %889 = vmatpush1.xpose.msra.mxu0 0.0
        %890 = vmatprep.subr.mxu0 0.0
        %891 = vmatpush1.xpose.msra.mxu0 0.0
        %892 = vmatprep.subr.mxu0 0.0
        %893 = vmatpush1.xpose.msra.mxu0 0.0
        %894 = vmatprep.subr.mxu0 0.0
        %895 = vmatpush1.xpose.msra.mxu0 0.0
        %896 = vmatprep.subr.mxu0 0.0
        %897 = vmatpush1.xpose.msra.mxu0 0.0
        %898 = vmatprep.subr.mxu0 0.0
        %899 = vmatpush1.xpose.msra.mxu0 0.0
        %900 = vmatprep.subr.mxu0 0.0
        %901 = vmatpush1.xpose.msra.mxu0 0.0
        %902 = vmatprep.subr.mxu0 0.0
        %903 = vmatpush1.xpose.msra.mxu0 0.0
        %904 = vmatprep.subr.mxu0 0.0
        %905 = vmatpush1.xpose.msra.mxu0 0.0
        %906 = vmatprep.subr.mxu0 0.0
        %907 = vmatpush1.xpose.msra.mxu0 0.0
        %908 = vmatprep.subr.mxu0 0.0
        %909 = vmatpush1.xpose.msra.mxu0 0.0
        %910 = vmatprep.subr.mxu0 0.0
        %911 = vmatpush1.xpose.msra.mxu0 0.0
        %912 = vmatprep.subr.mxu0 0.0
        %913 = vmatpush1.xpose.msra.mxu0 0.0
        %914 = vmatprep.subr.mxu0 0.0
        %915 = vmatpush1.xpose.msra.mxu0 0.0
        %916 = vmatprep.subr.mxu0 0.0
        %917 = vmatpush1.xpose.msra.mxu0 0.0
        %918 = vmatprep.subr.mxu0 0.0
        %919 = vmatpush1.xpose.msra.mxu0 0.0
        %920 = vmatprep.subr.mxu0 0.0
        %921 = vmatpush1.xpose.msra.mxu0 0.0
        %922 = vmatprep.mubr.f32.mxu0 0.0
        %923 = vmatmul.mubr.f32.gmra.mrb[0].mxu0 %v853
        %v924 = vpop.f32.mrb[0].mxu0
        %v925 = vadd.f32 0.0, %v924
        %v926 = vpop.f32.mrb[0].mxu0
        %927 = vdwg.mxu0
        %v928 = vsel %vm851, %v925, -inf
        %929 = vmax.xlane.f32.xlu0 %v928
        %v930 = vpop.xlane.xlu0 %929
        %v931 = vsub.f32 %v925, %v930
        %v932 = vmul.f32 %v931, 1.442695
        %v933 = vpow.pop %v932
        %v934 = vsel %vm851, %v933, 0.0
        %935 = vadd.xlane.f32.xlu0 %v934
        %v936 = vpop.xlane.xlu0 %935
        %v937 = vrcp.pop %v936
        %v938 = vmul.f32 %v933, %v937
        %939 = vst.msk [vmem:[%s585] sm:$0xff] %vm851, %v938
        %v941 = vsel %vm851, %v938, 0
        %943 = vmatprep.subr.mxu0 0.0
        %944 = vmatpush1.msra.mxu0 %v850
        %945 = vmatprep.subr.mxu0 0.0
        %946 = vmatpush1.msra.mxu0 0.0
        %947 = vmatprep.subr.mxu0 0.0
        %948 = vmatpush1.msra.mxu0 0.0
        %949 = vmatprep.subr.mxu0 0.0
        %950 = vmatpush1.msra.mxu0 0.0
        %951 = vmatprep.subr.mxu0 0.0
        %952 = vmatpush1.msra.mxu0 0.0
        %953 = vmatprep.subr.mxu0 0.0
        %954 = vmatpush1.msra.mxu0 0.0
        %955 = vmatprep.subr.mxu0 0.0
        %956 = vmatpush1.msra.mxu0 0.0
        %957 = vmatprep.subr.mxu0 0.0
        %958 = vmatpush1.msra.mxu0 0.0
        %959 = vmatprep.subr.mxu0 0.0
        %960 = vmatpush1.msra.mxu0 0.0
        %961 = vmatprep.subr.mxu0 0.0
        %962 = vmatpush1.msra.mxu0 0.0
        %963 = vmatprep.subr.mxu0 0.0
        %964 = vmatpush1.msra.mxu0 0.0
        %965 = vmatprep.subr.mxu0 0.0
        %966 = vmatpush1.msra.mxu0 0.0
        %967 = vmatprep.subr.mxu0 0.0
        %968 = vmatpush1.msra.mxu0 0.0
        %969 = vmatprep.subr.mxu0 0.0
        %970 = vmatpush1.msra.mxu0 0.0
        %971 = vmatprep.subr.mxu0 0.0
        %972 = vmatpush1.msra.mxu0 0.0
        %973 = vmatprep.subr.mxu0 0.0
        %974 = vmatpush1.msra.mxu0 0.0
        %975 = vmatprep.subr.mxu0 0.0
        %976 = vmatpush1.msra.mxu0 0.0
        %977 = vmatprep.subr.mxu0 0.0
        %978 = vmatpush1.msra.mxu0 0.0
        %979 = vmatprep.subr.mxu0 0.0
        %980 = vmatpush1.msra.mxu0 0.0
        %981 = vmatprep.subr.mxu0 0.0
        %982 = vmatpush1.msra.mxu0 0.0
        %983 = vmatprep.subr.mxu0 0.0
        %984 = vmatpush1.msra.mxu0 0.0
        %985 = vmatprep.subr.mxu0 0.0
        %986 = vmatpush1.msra.mxu0 0.0
        %987 = vmatprep.subr.mxu0 0.0
        %988 = vmatpush1.msra.mxu0 0.0
        %989 = vmatprep.subr.mxu0 0.0
        %990 = vmatpush1.msra.mxu0 0.0
        %991 = vmatprep.subr.mxu0 0.0
        %992 = vmatpush1.msra.mxu0 0.0
        %993 = vmatprep.subr.mxu0 0.0
        %994 = vmatpush1.msra.mxu0 0.0
        %995 = vmatprep.subr.mxu0 0.0
        %996 = vmatpush1.msra.mxu0 0.0
        %997 = vmatprep.subr.mxu0 0.0
        %998 = vmatpush1.msra.mxu0 0.0
        %999 = vmatprep.subr.mxu0 0.0
        %1000 = vmatpush1.msra.mxu0 0.0
        %1001 = vmatprep.subr.mxu0 0.0
        %1002 = vmatpush1.msra.mxu0 0.0
        %1003 = vmatprep.subr.mxu0 0.0
        %1004 = vmatpush1.msra.mxu0 0.0
        %1005 = vmatprep.subr.mxu0 0.0
        %1006 = vmatpush1.msra.mxu0 0.0
        %1007 = vmatprep.mubr.f32.mxu0 0.0
        %1008 = vmatmul.mubr.f32.gmra.mrb[0].mxu0 %v941
        %v1009 = vpop.f32.mrb[0].mxu0
        %v1010 = vadd.f32 0.0, %v1009
        %v1011 = vpop.f32.mrb[0].mxu0
        %1012 = vdwg.mxu0
        %1013 = vst.msk [vmem:[#allocation4] sm:$0xff] %vm851, %v1010
        %v1014 = vld [vmem:[#allocation2] sm:$0xff]
        %v1015 = vld [vmem:[#allocation3] sm:$0xff]
        %1016 = vrot.lane.b32.xlu0 %v846, 120
        %v1017 = vpop.permute.xlu0 %1016
        %1019 = vrot.lane.b32.xlu0 %v1014, 120
        %v1020 = vpop.permute.xlu0 %1019
        %v1021 = vsel %vm851, %v1017, 0
        %v1023 = vsel %vm851, %v1020, 0
        %1025 = vmatprep.subr.mxu0 0.0
        %1026 = vmatpush1.xpose.msra.mxu0 %v1023
        %1027 = vmatprep.subr.mxu0 0.0
        %1028 = vmatpush1.xpose.msra.mxu0 0.0
        %1029 = vmatprep.subr.mxu0 0.0
        %1030 = vmatpush1.xpose.msra.mxu0 0.0
        %1031 = vmatprep.subr.mxu0 0.0
        %1032 = vmatpush1.xpose.msra.mxu0 0.0
        %1033 = vmatprep.subr.mxu0 0.0
        %1034 = vmatpush1.xpose.msra.mxu0 0.0
        %1035 = vmatprep.subr.mxu0 0.0
        %1036 = vmatpush1.xpose.msra.mxu0 0.0
        %1037 = vmatprep.subr.mxu0 0.0
        %1038 = vmatpush1.xpose.msra.mxu0 0.0
        %1039 = vmatprep.subr.mxu0 0.0
        %1040 = vmatpush1.xpose.msra.mxu0 0.0
        %1041 = vmatprep.subr.mxu0 0.0
        %1042 = vmatpush1.xpose.msra.mxu0 0.0
        %1043 = vmatprep.subr.mxu0 0.0
        %1044 = vmatpush1.xpose.msra.mxu0 0.0
        %1045 = vmatprep.subr.mxu0 0.0
        %1046 = vmatpush1.xpose.msra.mxu0 0.0
        %1047 = vmatprep.subr.mxu0 0.0
        %1048 = vmatpush1.xpose.msra.mxu0 0.0
        %1049 = vmatprep.subr.mxu0 0.0
        %1050 = vmatpush1.xpose.msra.mxu0 0.0
        %1051 = vmatprep.subr.mxu0 0.0
        %1052 = vmatpush1.xpose.msra.mxu0 0.0
        %1053 = vmatprep.subr.mxu0 0.0
        %1054 = vmatpush1.xpose.msra.mxu0 0.0
        %1055 = vmatprep.subr.mxu0 0.0
        %1056 = vmatpush1.xpose.msra.mxu0 0.0
        %1057 = vmatprep.subr.mxu0 0.0
        %1058 = vmatpush1.xpose.msra.mxu0 0.0
        %1059 = vmatprep.subr.mxu0 0.0
        %1060 = vmatpush1.xpose.msra.mxu0 0.0
        %1061 = vmatprep.subr.mxu0 0.0
        %1062 = vmatpush1.xpose.msra.mxu0 0.0
        %1063 = vmatprep.subr.mxu0 0.0
        %1064 = vmatpush1.xpose.msra.mxu0 0.0
        %1065 = vmatprep.subr.mxu0 0.0
        %1066 = vmatpush1.xpose.msra.mxu0 0.0
        %1067 = vmatprep.subr.mxu0 0.0
        %1068 = vmatpush1.xpose.msra.mxu0 0.0
        %1069 = vmatprep.subr.mxu0 0.0
        %1070 = vmatpush1.xpose.msra.mxu0 0.0
        %1071 = vmatprep.subr.mxu0 0.0
        %1072 = vmatpush1.xpose.msra.mxu0 0.0
        %1073 = vmatprep.subr.mxu0 0.0
        %1074 = vmatpush1.xpose.msra.mxu0 0.0
        %1075 = vmatprep.subr.mxu0 0.0
        %1076 = vmatpush1.xpose.msra.mxu0 0.0
        %1077 = vmatprep.subr.mxu0 0.0
        %1078 = vmatpush1.xpose.msra.mxu0 0.0
        %1079 = vmatprep.subr.mxu0 0.0
        %1080 = vmatpush1.xpose.msra.mxu0 0.0
        %1081 = vmatprep.subr.mxu0 0.0
        %1082 = vmatpush1.xpose.msra.mxu0 0.0
        %1083 = vmatprep.subr.mxu0 0.0
        %1084 = vmatpush1.xpose.msra.mxu0 0.0
        %1085 = vmatprep.subr.mxu0 0.0
        %1086 = vmatpush1.xpose.msra.mxu0 0.0
        %1087 = vmatprep.subr.mxu0 0.0
        %1088 = vmatpush1.xpose.msra.mxu0 0.0
        %1089 = vmatprep.mubr.f32.mxu0 0.0
        %1090 = vmatmul.mubr.f32.gmra.mrb[0].mxu0 %v1021
        %v1091 = vpop.f32.mrb[0].mxu0
        %v1092 = vadd.f32 0.0, %v1091
        %v1093 = vpop.f32.mrb[0].mxu0
        %1094 = vdwg.mxu0
        %v1095 = vsel %vm851, %v1092, -inf
        %1096 = vmax.xlane.f32.xlu0 %v1095
        %v1097 = vpop.xlane.xlu0 %1096
        %v1098 = vsub.f32 %v1092, %v1097
        %v1099 = vmul.f32 %v1098, 1.442695
        %v1100 = vpow.pop %v1099
        %v1101 = vsel %vm851, %v1100, 0.0
        %1102 = vadd.xlane.f32.xlu0 %v1101
        %v1103 = vpop.xlane.xlu0 %1102
        %v1104 = vrcp.pop %v1103
        %v1105 = vmul.f32 %v1100, %v1104
        %s1106 = scalar_lea.vmem %s585, 8 [#allocation18]
        %1107 = vst.msk [vmem:[%s1106] sm:$0xff] %vm851, %v1105
        %1109 = vrot.lane.b32.xlu0 %v1015, 120
        %v1110 = vpop.permute.xlu0 %1109
        %v1113 = vsel %vm851, %v1105, 0
        %1115 = vmatprep.subr.mxu0 0.0
        %1116 = vmatpush1.msra.mxu0 %v1110
        %1117 = vmatprep.subr.mxu0 0.0
        %1118 = vmatpush1.msra.mxu0 0.0
        %1119 = vmatprep.subr.mxu0 0.0
        %1120 = vmatpush1.msra.mxu0 0.0
        %1121 = vmatprep.subr.mxu0 0.0
        %1122 = vmatpush1.msra.mxu0 0.0
        %1123 = vmatprep.subr.mxu0 0.0
        %1124 = vmatpush1.msra.mxu0 0.0
        %1125 = vmatprep.subr.mxu0 0.0
        %1126 = vmatpush1.msra.mxu0 0.0
        %1127 = vmatprep.subr.mxu0 0.0
        %1128 = vmatpush1.msra.mxu0 0.0
        %1129 = vmatprep.subr.mxu0 0.0
        %1130 = vmatpush1.msra.mxu0 0.0
        %1131 = vmatprep.subr.mxu0 0.0
        %1132 = vmatpush1.msra.mxu0 0.0
        %1133 = vmatprep.subr.mxu0 0.0
        %1134 = vmatpush1.msra.mxu0 0.0
        %1135 = vmatprep.subr.mxu0 0.0
        %1136 = vmatpush1.msra.mxu0 0.0
        %1137 = vmatprep.subr.mxu0 0.0
        %1138 = vmatpush1.msra.mxu0 0.0
        %1139 = vmatprep.subr.mxu0 0.0
        %1140 = vmatpush1.msra.mxu0 0.0
        %1141 = vmatprep.subr.mxu0 0.0
        %1142 = vmatpush1.msra.mxu0 0.0
        %1143 = vmatprep.subr.mxu0 0.0
        %1144 = vmatpush1.msra.mxu0 0.0
        %1145 = vmatprep.subr.mxu0 0.0
        %1146 = vmatpush1.msra.mxu0 0.0
        %1147 = vmatprep.subr.mxu0 0.0
        %1148 = vmatpush1.msra.mxu0 0.0
        %1149 = vmatprep.subr.mxu0 0.0
        %1150 = vmatpush1.msra.mxu0 0.0
        %1151 = vmatprep.subr.mxu0 0.0
        %1152 = vmatpush1.msra.mxu0 0.0
        %1153 = vmatprep.subr.mxu0 0.0
        %1154 = vmatpush1.msra.mxu0 0.0
        %1155 = vmatprep.subr.mxu0 0.0
        %1156 = vmatpush1.msra.mxu0 0.0
        %1157 = vmatprep.subr.mxu0 0.0
        %1158 = vmatpush1.msra.mxu0 0.0
        %1159 = vmatprep.subr.mxu0 0.0
        %1160 = vmatpush1.msra.mxu0 0.0
        %1161 = vmatprep.subr.mxu0 0.0
        %1162 = vmatpush1.msra.mxu0 0.0
        %1163 = vmatprep.subr.mxu0 0.0
        %1164 = vmatpush1.msra.mxu0 0.0
        %1165 = vmatprep.subr.mxu0 0.0
        %1166 = vmatpush1.msra.mxu0 0.0
        %1167 = vmatprep.subr.mxu0 0.0
        %1168 = vmatpush1.msra.mxu0 0.0
        %1169 = vmatprep.subr.mxu0 0.0
        %1170 = vmatpush1.msra.mxu0 0.0
        %1171 = vmatprep.subr.mxu0 0.0
        %1172 = vmatpush1.msra.mxu0 0.0
        %1173 = vmatprep.subr.mxu0 0.0
        %1174 = vmatpush1.msra.mxu0 0.0
        %1175 = vmatprep.subr.mxu0 0.0
        %1176 = vmatpush1.msra.mxu0 0.0
        %1177 = vmatprep.subr.mxu0 0.0
        %1178 = vmatpush1.msra.mxu0 0.0
        %1179 = vmatprep.mubr.f32.mxu0 0.0
        %1180 = vmatmul.mubr.f32.gmra.mrb[0].mxu0 %v1113
        %v1181 = vpop.f32.mrb[0].mxu0
        %v1182 = vadd.f32 0.0, %v1181
        %v1183 = vpop.f32.mrb[0].mxu0
        %1184 = vdwg.mxu0
        %1186 = vrot.lane.b32.xlu0 %v1182, 8
        %v1187 = vpop.permute.xlu0 %1186
        %vm1189 = vcmask 130112
        %1190 = vst.msk [vmem:[#allocation4] sm:$0xff] %vm1189, %v1187
        %v1191 = vld [vmem:[#allocation2] sm:$0xff]
        %v1192 = vld [vmem:[#allocation3] sm:$0xff]
        %1193 = vrot.lane.b32.xlu0 %v846, 112
        %v1194 = vpop.permute.xlu0 %1193
        %1196 = vrot.lane.b32.xlu0 %v1191, 112
        %v1197 = vpop.permute.xlu0 %1196
        %v1198 = vsel %vm851, %v1194, 0
        %v1200 = vsel %vm851, %v1197, 0
        %1202 = vmatprep.subr.mxu0 0.0
        %1203 = vmatpush1.xpose.msra.mxu0 %v1200
        %1204 = vmatprep.subr.mxu0 0.0
        %1205 = vmatpush1.xpose.msra.mxu0 0.0
        %1206 = vmatprep.subr.mxu0 0.0
        %1207 = vmatpush1.xpose.msra.mxu0 0.0
        %1208 = vmatprep.subr.mxu0 0.0
        %1209 = vmatpush1.xpose.msra.mxu0 0.0
        %1210 = vmatprep.subr.mxu0 0.0
        %1211 = vmatpush1.xpose.msra.mxu0 0.0
        %1212 = vmatprep.subr.mxu0 0.0
        %1213 = vmatpush1.xpose.msra.mxu0 0.0
        %1214 = vmatprep.subr.mxu0 0.0
        %1215 = vmatpush1.xpose.msra.mxu0 0.0
        %1216 = vmatprep.subr.mxu0 0.0
        %1217 = vmatpush1.xpose.msra.mxu0 0.0
        %1218 = vmatprep.subr.mxu0 0.0
        %1219 = vmatpush1.xpose.msra.mxu0 0.0
        %1220 = vmatprep.subr.mxu0 0.0
        %1221 = vmatpush1.xpose.msra.mxu0 0.0
        %1222 = vmatprep.subr.mxu0 0.0
        %1223 = vmatpush1.xpose.msra.mxu0 0.0
        %1224 = vmatprep.subr.mxu0 0.0
        %1225 = vmatpush1.xpose.msra.mxu0 0.0
        %1226 = vmatprep.subr.mxu0 0.0
        %1227 = vmatpush1.xpose.msra.mxu0 0.0
        %1228 = vmatprep.subr.mxu0 0.0
        %1229 = vmatpush1.xpose.msra.mxu0 0.0
        %1230 = vmatprep.subr.mxu0 0.0
        %1231 = vmatpush1.xpose.msra.mxu0 0.0
        %1232 = vmatprep.subr.mxu0 0.0
        %1233 = vmatpush1.xpose.msra.mxu0 0.0
        %1234 = vmatprep.subr.mxu0 0.0
        %1235 = vmatpush1.xpose.msra.mxu0 0.0
        %1236 = vmatprep.subr.mxu0 0.0
        %1237 = vmatpush1.xpose.msra.mxu0 0.0
        %1238 = vmatprep.subr.mxu0 0.0
        %1239 = vmatpush1.xpose.msra.mxu0 0.0
        %1240 = vmatprep.subr.mxu0 0.0
        %1241 = vmatpush1.xpose.msra.mxu0 0.0
        %1242 = vmatprep.subr.mxu0 0.0
        %1243 = vmatpush1.xpose.msra.mxu0 0.0
        %1244 = vmatprep.subr.mxu0 0.0
        %1245 = vmatpush1.xpose.msra.mxu0 0.0
        %1246 = vmatprep.subr.mxu0 0.0
        %1247 = vmatpush1.xpose.msra.mxu0 0.0
        %1248 = vmatprep.subr.mxu0 0.0
        %1249 = vmatpush1.xpose.msra.mxu0 0.0
        %1250 = vmatprep.subr.mxu0 0.0
        %1251 = vmatpush1.xpose.msra.mxu0 0.0
        %1252 = vmatprep.subr.mxu0 0.0
        %1253 = vmatpush1.xpose.msra.mxu0 0.0
        %1254 = vmatprep.subr.mxu0 0.0
        %1255 = vmatpush1.xpose.msra.mxu0 0.0
        %1256 = vmatprep.subr.mxu0 0.0
        %1257 = vmatpush1.xpose.msra.mxu0 0.0
        %1258 = vmatprep.subr.mxu0 0.0
        %1259 = vmatpush1.xpose.msra.mxu0 0.0
        %1260 = vmatprep.subr.mxu0 0.0
        %1261 = vmatpush1.xpose.msra.mxu0 0.0
        %1262 = vmatprep.subr.mxu0 0.0
        %1263 = vmatpush1.xpose.msra.mxu0 0.0
        %1264 = vmatprep.subr.mxu0 0.0
        %1265 = vmatpush1.xpose.msra.mxu0 0.0
        %1266 = vmatprep.mubr.f32.mxu0 0.0
        %1267 = vmatmul.mubr.f32.gmra.mrb[0].mxu0 %v1198
        %v1268 = vpop.f32.mrb[0].mxu0
        %v1269 = vadd.f32 0.0, %v1268
        %v1270 = vpop.f32.mrb[0].mxu0
        %1271 = vdwg.mxu0
        %v1272 = vsel %vm851, %v1269, -inf
        %1273 = vmax.xlane.f32.xlu0 %v1272
        %v1274 = vpop.xlane.xlu0 %1273
        %v1275 = vsub.f32 %v1269, %v1274
        %v1276 = vmul.f32 %v1275, 1.442695
        %v1277 = vpow.pop %v1276
        %v1278 = vsel %vm851, %v1277, 0.0
        %1279 = vadd.xlane.f32.xlu0 %v1278
        %v1280 = vpop.xlane.xlu0 %1279
        %v1281 = vrcp.pop %v1280
        %v1282 = vmul.f32 %v1277, %v1281
        %s1283 = scalar_lea.vmem %s585, 16 [#allocation18]
        %1284 = vst.msk [vmem:[%s1283] sm:$0xff] %vm851, %v1282
        %1286 = vrot.lane.b32.xlu0 %v1192, 112
        %v1287 = vpop.permute.xlu0 %1286
        %v1290 = vsel %vm851, %v1282, 0
        %1292 = vmatprep.subr.mxu0 0.0
        %1293 = vmatpush1.msra.mxu0 %v1287
        %1294 = vmatprep.subr.mxu0 0.0
        %1295 = vmatpush1.msra.mxu0 0.0
        %1296 = vmatprep.subr.mxu0 0.0
        %1297 = vmatpush1.msra.mxu0 0.0
        %1298 = vmatprep.subr.mxu0 0.0
        %1299 = vmatpush1.msra.mxu0 0.0
        %1300 = vmatprep.subr.mxu0 0.0
        %1301 = vmatpush1.msra.mxu0 0.0
        %1302 = vmatprep.subr.mxu0 0.0
        %1303 = vmatpush1.msra.mxu0 0.0
        %1304 = vmatprep.subr.mxu0 0.0
        %1305 = vmatpush1.msra.mxu0 0.0
        %1306 = vmatprep.subr.mxu0 0.0
        %1307 = vmatpush1.msra.mxu0 0.0
        %1308 = vmatprep.subr.mxu0 0.0
        %1309 = vmatpush1.msra.mxu0 0.0
        %1310 = vmatprep.subr.mxu0 0.0
        %1311 = vmatpush1.msra.mxu0 0.0
        %1312 = vmatprep.subr.mxu0 0.0
        %1313 = vmatpush1.msra.mxu0 0.0
        %1314 = vmatprep.subr.mxu0 0.0
        %1315 = vmatpush1.msra.mxu0 0.0
        %1316 = vmatprep.subr.mxu0 0.0
        %1317 = vmatpush1.msra.mxu0 0.0
        %1318 = vmatprep.subr.mxu0 0.0
        %1319 = vmatpush1.msra.mxu0 0.0
        %1320 = vmatprep.subr.mxu0 0.0
        %1321 = vmatpush1.msra.mxu0 0.0
        %1322 = vmatprep.subr.mxu0 0.0
        %1323 = vmatpush1.msra.mxu0 0.0
        %1324 = vmatprep.subr.mxu0 0.0
        %1325 = vmatpush1.msra.mxu0 0.0
        %1326 = vmatprep.subr.mxu0 0.0
        %1327 = vmatpush1.msra.mxu0 0.0
        %1328 = vmatprep.subr.mxu0 0.0
        %1329 = vmatpush1.msra.mxu0 0.0
        %1330 = vmatprep.subr.mxu0 0.0
        %1331 = vmatpush1.msra.mxu0 0.0
        %1332 = vmatprep.subr.mxu0 0.0
        %1333 = vmatpush1.msra.mxu0 0.0
        %1334 = vmatprep.subr.mxu0 0.0
        %1335 = vmatpush1.msra.mxu0 0.0
        %1336 = vmatprep.subr.mxu0 0.0
        %1337 = vmatpush1.msra.mxu0 0.0
        %1338 = vmatprep.subr.mxu0 0.0
        %1339 = vmatpush1.msra.mxu0 0.0
        %1340 = vmatprep.subr.mxu0 0.0
        %1341 = vmatpush1.msra.mxu0 0.0
        %1342 = vmatprep.subr.mxu0 0.0
        %1343 = vmatpush1.msra.mxu0 0.0
        %1344 = vmatprep.subr.mxu0 0.0
        %1345 = vmatpush1.msra.mxu0 0.0
        %1346 = vmatprep.subr.mxu0 0.0
        %1347 = vmatpush1.msra.mxu0 0.0
        %1348 = vmatprep.subr.mxu0 0.0
        %1349 = vmatpush1.msra.mxu0 0.0
        %1350 = vmatprep.subr.mxu0 0.0
        %1351 = vmatpush1.msra.mxu0 0.0
        %1352 = vmatprep.subr.mxu0 0.0
        %1353 = vmatpush1.msra.mxu0 0.0
        %1354 = vmatprep.subr.mxu0 0.0
        %1355 = vmatpush1.msra.mxu0 0.0
        %1356 = vmatprep.mubr.f32.mxu0 0.0
        %1357 = vmatmul.mubr.f32.gmra.mrb[0].mxu0 %v1290
        %v1358 = vpop.f32.mrb[0].mxu0
        %v1359 = vadd.f32 0.0, %v1358
        %v1360 = vpop.f32.mrb[0].mxu0
        %1361 = vdwg.mxu0
        %1363 = vrot.lane.b32.xlu0 %v1359, 16
        %v1364 = vpop.permute.xlu0 %1363
        %vm1366 = vcmask 195712
        %1367 = vst.msk [vmem:[#allocation4] sm:$0xff] %vm1366, %v1364
        %v1368 = vld [vmem:[#allocation2] sm:$0xff]
        %v1369 = vld [vmem:[#allocation3] sm:$0xff]
        %1370 = vrot.lane.b32.xlu0 %v846, 104
        %v1371 = vpop.permute.xlu0 %1370
        %1373 = vrot.lane.b32.xlu0 %v1368, 104
        %v1374 = vpop.permute.xlu0 %1373
        %v1375 = vsel %vm851, %v1371, 0
        %v1377 = vsel %vm851, %v1374, 0
        %1379 = vmatprep.subr.mxu0 0.0
        %1380 = vmatpush1.xpose.msra.mxu0 %v1377
        %1381 = vmatprep.subr.mxu0 0.0
        %1382 = vmatpush1.xpose.msra.mxu0 0.0
        %1383 = vmatprep.subr.mxu0 0.0
        %1384 = vmatpush1.xpose.msra.mxu0 0.0
        %1385 = vmatprep.subr.mxu0 0.0
        %1386 = vmatpush1.xpose.msra.mxu0 0.0
        %1387 = vmatprep.subr.mxu0 0.0
        %1388 = vmatpush1.xpose.msra.mxu0 0.0
        %1389 = vmatprep.subr.mxu0 0.0
        %1390 = vmatpush1.xpose.msra.mxu0 0.0
        %1391 = vmatprep.subr.mxu0 0.0
        %1392 = vmatpush1.xpose.msra.mxu0 0.0
        %1393 = vmatprep.subr.mxu0 0.0
        %1394 = vmatpush1.xpose.msra.mxu0 0.0
        %1395 = vmatprep.subr.mxu0 0.0
        %1396 = vmatpush1.xpose.msra.mxu0 0.0
        %1397 = vmatprep.subr.mxu0 0.0
        %1398 = vmatpush1.xpose.msra.mxu0 0.0
        %1399 = vmatprep.subr.mxu0 0.0
        %1400 = vmatpush1.xpose.msra.mxu0 0.0
        %1401 = vmatprep.subr.mxu0 0.0
        %1402 = vmatpush1.xpose.msra.mxu0 0.0
        %1403 = vmatprep.subr.mxu0 0.0
        %1404 = vmatpush1.xpose.msra.mxu0 0.0
        %1405 = vmatprep.subr.mxu0 0.0
        %1406 = vmatpush1.xpose.msra.mxu0 0.0
        %1407 = vmatprep.subr.mxu0 0.0
        %1408 = vmatpush1.xpose.msra.mxu0 0.0
        %1409 = vmatprep.subr.mxu0 0.0
        %1410 = vmatpush1.xpose.msra.mxu0 0.0
        %1411 = vmatprep.subr.mxu0 0.0
        %1412 = vmatpush1.xpose.msra.mxu0 0.0
        %1413 = vmatprep.subr.mxu0 0.0
        %1414 = vmatpush1.xpose.msra.mxu0 0.0
        %1415 = vmatprep.subr.mxu0 0.0
        %1416 = vmatpush1.xpose.msra.mxu0 0.0
        %1417 = vmatprep.subr.mxu0 0.0
        %1418 = vmatpush1.xpose.msra.mxu0 0.0
        %1419 = vmatprep.subr.mxu0 0.0
        %1420 = vmatpush1.xpose.msra.mxu0 0.0
        %1421 = vmatprep.subr.mxu0 0.0
        %1422 = vmatpush1.xpose.msra.mxu0 0.0
        %1423 = vmatprep.subr.mxu0 0.0
        %1424 = vmatpush1.xpose.msra.mxu0 0.0
        %1425 = vmatprep.subr.mxu0 0.0
        %1426 = vmatpush1.xpose.msra.mxu0 0.0
        %1427 = vmatprep.subr.mxu0 0.0
        %1428 = vmatpush1.xpose.msra.mxu0 0.0
        %1429 = vmatprep.subr.mxu0 0.0
        %1430 = vmatpush1.xpose.msra.mxu0 0.0
        %1431 = vmatprep.subr.mxu0 0.0
        %1432 = vmatpush1.xpose.msra.mxu0 0.0
        %1433 = vmatprep.subr.mxu0 0.0
        %1434 = vmatpush1.xpose.msra.mxu0 0.0
        %1435 = vmatprep.subr.mxu0 0.0
        %1436 = vmatpush1.xpose.msra.mxu0 0.0
        %1437 = vmatprep.subr.mxu0 0.0
        %1438 = vmatpush1.xpose.msra.mxu0 0.0
        %1439 = vmatprep.subr.mxu0 0.0
        %1440 = vmatpush1.xpose.msra.mxu0 0.0
        %1441 = vmatprep.subr.mxu0 0.0
        %1442 = vmatpush1.xpose.msra.mxu0 0.0
        %1443 = vmatprep.mubr.f32.mxu0 0.0
        %1444 = vmatmul.mubr.f32.gmra.mrb[0].mxu0 %v1375
        %v1445 = vpop.f32.mrb[0].mxu0
        %v1446 = vadd.f32 0.0, %v1445
        %v1447 = vpop.f32.mrb[0].mxu0
        %1448 = vdwg.mxu0
        %v1449 = vsel %vm851, %v1446, -inf
        %1450 = vmax.xlane.f32.xlu0 %v1449
        %v1451 = vpop.xlane.xlu0 %1450
        %v1452 = vsub.f32 %v1446, %v1451
        %v1453 = vmul.f32 %v1452, 1.442695
        %v1454 = vpow.pop %v1453
        %v1455 = vsel %vm851, %v1454, 0.0
        %1456 = vadd.xlane.f32.xlu0 %v1455
        %v1457 = vpop.xlane.xlu0 %1456
        %v1458 = vrcp.pop %v1457
        %v1459 = vmul.f32 %v1454, %v1458
        %s1460 = scalar_lea.vmem %s585, 24 [#allocation18]
        %1461 = vst.msk [vmem:[%s1460] sm:$0xff] %vm851, %v1459
        %1463 = vrot.lane.b32.xlu0 %v1369, 104
        %v1464 = vpop.permute.xlu0 %1463
        %v1467 = vsel %vm851, %v1459, 0
        %1469 = vmatprep.subr.mxu0 0.0
        %1470 = vmatpush1.msra.mxu0 %v1464
        %1471 = vmatprep.subr.mxu0 0.0
        %1472 = vmatpush1.msra.mxu0 0.0
        %1473 = vmatprep.subr.mxu0 0.0
        %1474 = vmatpush1.msra.mxu0 0.0
        %1475 = vmatprep.subr.mxu0 0.0
        %1476 = vmatpush1.msra.mxu0 0.0
        %1477 = vmatprep.subr.mxu0 0.0
        %1478 = vmatpush1.msra.mxu0 0.0
        %1479 = vmatprep.subr.mxu0 0.0
        %1480 = vmatpush1.msra.mxu0 0.0
        %1481 = vmatprep.subr.mxu0 0.0
        %1482 = vmatpush1.msra.mxu0 0.0
        %1483 = vmatprep.subr.mxu0 0.0
        %1484 = vmatpush1.msra.mxu0 0.0
        %1485 = vmatprep.subr.mxu0 0.0
        %1486 = vmatpush1.msra.mxu0 0.0
        %1487 = vmatprep.subr.mxu0 0.0
        %1488 = vmatpush1.msra.mxu0 0.0
        %1489 = vmatprep.subr.mxu0 0.0
        %1490 = vmatpush1.msra.mxu0 0.0
        %1491 = vmatprep.subr.mxu0 0.0
        %1492 = vmatpush1.msra.mxu0 0.0
        %1493 = vmatprep.subr.mxu0 0.0
        %1494 = vmatpush1.msra.mxu0 0.0
        %1495 = vmatprep.subr.mxu0 0.0
        %1496 = vmatpush1.msra.mxu0 0.0
        %1497 = vmatprep.subr.mxu0 0.0
        %1498 = vmatpush1.msra.mxu0 0.0
        %1499 = vmatprep.subr.mxu0 0.0
        %1500 = vmatpush1.msra.mxu0 0.0
        %1501 = vmatprep.subr.mxu0 0.0
        %1502 = vmatpush1.msra.mxu0 0.0
        %1503 = vmatprep.subr.mxu0 0.0
        %1504 = vmatpush1.msra.mxu0 0.0
        %1505 = vmatprep.subr.mxu0 0.0
        %1506 = vmatpush1.msra.mxu0 0.0
        %1507 = vmatprep.subr.mxu0 0.0
        %1508 = vmatpush1.msra.mxu0 0.0
        %1509 = vmatprep.subr.mxu0 0.0
        %1510 = vmatpush1.msra.mxu0 0.0
        %1511 = vmatprep.subr.mxu0 0.0
        %1512 = vmatpush1.msra.mxu0 0.0
        %1513 = vmatprep.subr.mxu0 0.0
        %1514 = vmatpush1.msra.mxu0 0.0
        %1515 = vmatprep.subr.mxu0 0.0
        %1516 = vmatpush1.msra.mxu0 0.0
        %1517 = vmatprep.subr.mxu0 0.0
        %1518 = vmatpush1.msra.mxu0 0.0
        %1519 = vmatprep.subr.mxu0 0.0
        %1520 = vmatpush1.msra.mxu0 0.0
        %1521 = vmatprep.subr.mxu0 0.0
        %1522 = vmatpush1.msra.mxu0 0.0
        %1523 = vmatprep.subr.mxu0 0.0
        %1524 = vmatpush1.msra.mxu0 0.0
        %1525 = vmatprep.subr.mxu0 0.0
        %1526 = vmatpush1.msra.mxu0 0.0
        %1527 = vmatprep.subr.mxu0 0.0
        %1528 = vmatpush1.msra.mxu0 0.0
        %1529 = vmatprep.subr.mxu0 0.0
        %1530 = vmatpush1.msra.mxu0 0.0
        %1531 = vmatprep.subr.mxu0 0.0
        %1532 = vmatpush1.msra.mxu0 0.0
        %1533 = vmatprep.mubr.f32.mxu0 0.0
        %1534 = vmatmul.mubr.f32.gmra.mrb[0].mxu0 %v1467
        %v1535 = vpop.f32.mrb[0].mxu0
        %v1536 = vadd.f32 0.0, %v1535
        %v1537 = vpop.f32.mrb[0].mxu0
        %1538 = vdwg.mxu0
        %1540 = vrot.lane.b32.xlu0 %v1536, 24
        %v1541 = vpop.permute.xlu0 %1540
        %vm1543 = vcmask 261312
        %1544 = vst.msk [vmem:[#allocation4] sm:$0xff] %vm1543, %v1541
        %v1545 = vld [vmem:[#allocation4] sm:$0xff]
        %v1546 = vld [vmem:[%s9] sm:$0xff]
        %v1547 = vld [vmem:[%s9 + $0x8] sm:$0xff]
        %v1548 = vld [vmem:[%s9 + $0x10] sm:$0xff]
        %v1549 = vld [vmem:[%s9 + $0x18] sm:$0xff]
        %v1550 = vld [vmem:[%s10] sm:$0x1]
        %v1552 = vlaneseq
        %v1553 = vshrl.u32 %v1552, 7
        %v1554 = vsub.s32 0, %v1553
        %v1555 = vrot.slane %v1550, %v1554
        %v1558 = vsel %vm775, %v1545, 0
        %1560 = vmatprep.subr.mxu0 0.0
        %1561 = vmatpush1.msra.mxu0 %v1546
        %1562 = vmatprep.subr.mxu0 0.0
        %1563 = vmatpush1.msra.mxu0 %v1547
        %1564 = vmatprep.subr.mxu0 0.0
        %1565 = vmatpush1.msra.mxu0 %v1548
        %1566 = vmatprep.subr.mxu0 0.0
        %1567 = vmatpush1.msra.mxu0 %v1549
        %1568 = vmatprep.subr.mxu0 0.0
        %1569 = vmatpush1.msra.mxu0 0.0
        %1570 = vmatprep.subr.mxu0 0.0
        %1571 = vmatpush1.msra.mxu0 0.0
        %1572 = vmatprep.subr.mxu0 0.0
        %1573 = vmatpush1.msra.mxu0 0.0
        %1574 = vmatprep.subr.mxu0 0.0
        %1575 = vmatpush1.msra.mxu0 0.0
        %1576 = vmatprep.subr.mxu0 0.0
        %1577 = vmatpush1.msra.mxu0 0.0
        %1578 = vmatprep.subr.mxu0 0.0
        %1579 = vmatpush1.msra.mxu0 0.0
        %1580 = vmatprep.subr.mxu0 0.0
        %1581 = vmatpush1.msra.mxu0 0.0
        %1582 = vmatprep.subr.mxu0 0.0
        %1583 = vmatpush1.msra.mxu0 0.0
        %1584 = vmatprep.subr.mxu0 0.0
        %1585 = vmatpush1.msra.mxu0 0.0
        %1586 = vmatprep.subr.mxu0 0.0
        %1587 = vmatpush1.msra.mxu0 0.0
        %1588 = vmatprep.subr.mxu0 0.0
        %1589 = vmatpush1.msra.mxu0 0.0
        %1590 = vmatprep.subr.mxu0 0.0
        %1591 = vmatpush1.msra.mxu0 0.0
        %1592 = vmatprep.subr.mxu0 0.0
        %1593 = vmatpush1.msra.mxu0 0.0
        %1594 = vmatprep.subr.mxu0 0.0
        %1595 = vmatpush1.msra.mxu0 0.0
        %1596 = vmatprep.subr.mxu0 0.0
        %1597 = vmatpush1.msra.mxu0 0.0
        %1598 = vmatprep.subr.mxu0 0.0
        %1599 = vmatpush1.msra.mxu0 0.0
        %1600 = vmatprep.subr.mxu0 0.0
        %1601 = vmatpush1.msra.mxu0 0.0
        %1602 = vmatprep.subr.mxu0 0.0
        %1603 = vmatpush1.msra.mxu0 0.0
        %1604 = vmatprep.subr.mxu0 0.0
        %1605 = vmatpush1.msra.mxu0 0.0
        %1606 = vmatprep.subr.mxu0 0.0
        %1607 = vmatpush1.msra.mxu0 0.0
        %1608 = vmatprep.subr.mxu0 0.0
        %1609 = vmatpush1.msra.mxu0 0.0
        %1610 = vmatprep.subr.mxu0 0.0
        %1611 = vmatpush1.msra.mxu0 0.0
        %1612 = vmatprep.subr.mxu0 0.0
        %1613 = vmatpush1.msra.mxu0 0.0
        %1614 = vmatprep.subr.mxu0 0.0
        %1615 = vmatpush1.msra.mxu0 0.0
        %1616 = vmatprep.subr.mxu0 0.0
        %1617 = vmatpush1.msra.mxu0 0.0
        %1618 = vmatprep.subr.mxu0 0.0
        %1619 = vmatpush1.msra.mxu0 0.0
        %1620 = vmatprep.subr.mxu0 0.0
        %1621 = vmatpush1.msra.mxu0 0.0
        %1622 = vmatprep.subr.mxu0 0.0
        %1623 = vmatpush1.msra.mxu0 0.0
        %1624 = vmatprep.mubr.f32.mxu0 0.0
        %1625 = vmatmul.mubr.f32.gmra.mrb[0].mxu0 %v1558
        %v1626 = vpop.f32.mrb[0].mxu0
        %v1627 = vadd.f32 %v1555, %v1626
        %v1628 = vpop.f32.mrb[0].mxu0
        %1629 = vdwg.mxu0
        %1630 = vst.msk [vmem:[%s578] sm:$0xff] %vm775, %v1627
        %s1631 = sand.u32 %s308, 1
        %s1632 = scalar_lea.sflag [#allocation7], %s1631
        %s1633 = sand.u32 %s308, 1
        %s1634 = smul.addr %s1633, 8
        %s1635 = scalar_lea.vmem [#allocation17], %s1634
        %s1636 = sand.u32 %s336, 1
        %s1637 = scalar_lea.sflag [#allocation19], %s1636
        %s1638 = sand.u32 %s336, 1
        %s1639 = smul.addr %s1638, 32
        %s1640 = scalar_lea.vmem [#allocation18], %s1639
        // Predicated region
        $region97: #{tpu_custom_call.1} parent=63 // pred_check
          %p1641 = pneg %p318
        $region98: #{tpu_custom_call.1} parent=63 // pred_check_branch
          %1643 = sbr.rel (%p1641) target = $region100
        $region99: #{tpu_custom_call.1} parent=63 // pred_region
          %s1645 = ssub.s32 128, 128
          %1646 = vsyncadd %s1632, %s1645
          %s1647 = sadd.s32 %s43, %s42
          %s1648 = smul.addr %s1647, 128
          %s1649 = scalar_lea.hbm %s11, %s1648
          %s1651 = sshll.u32 %s1635, 4
          %s1652 = int_to_ptr.vmem [resolvable:$true] %s1651
          %1654 = dma.vmem_to_hbm [thread:$0]  %s1652, 128, %s1649, %s1632
        $region100: #{tpu_custom_call.1} parent=63 // pred_fallthru
          _
        // Predicated region
        $region101: #{tpu_custom_call.1} parent=63 // pred_check
          %p1655 = pneg %p346
        $region102: #{tpu_custom_call.1} parent=63 // pred_check_branch
          %1657 = sbr.rel (%p1655) target = $region104
        $region103: #{tpu_custom_call.1} parent=63 // pred_region
          %s1659 = ssub.s32 512, 512
          %1660 = vsyncadd %s1637, %s1659
          %s1661 = smul.addr %s42, 4
          %s1662 = sadd.s32 %s43, %s1661
          %s1663 = smul.addr %s1662, 128
          %s1664 = scalar_lea.hbm %s12, %s1663
          %s1665 = sshll.u32 %s1640, 4
          %s1666 = int_to_ptr.vmem [resolvable:$true] %s1665
          %1671 = dma.vmem_to_hbm [thread:$0]  %s1666, 512, %s1664, %s1637, 128, 128, 8
        $region104: #{tpu_custom_call.1} parent=63 // pred_fallthru
          _
      $region64: #{tpu_custom_call.1} parent=5 // pred_fallthru
        _
      %p1672 = scmp.le.s32.totalorder 2, %s33
      // Predicated region
      $region105: #{tpu_custom_call.1} parent=5 // pred_check
        %p1673 = pneg %p1672
      $region106: #{tpu_custom_call.1} parent=5 // pred_check_branch
        %1675 = sbr.rel (%p1673) target = $region108
      $region107: #{tpu_custom_call.1} parent=5 // pred_region
        %s1676 = ssub.s32 %s33, 2
        // Predicated region
        $region109: #{tpu_custom_call.1} parent=107 // pred_check
          %p1677 = pneg %p324
        $region110: #{tpu_custom_call.1} parent=107 // pred_check_branch
          %1679 = sbr.rel (%p1677) target = $region112
        $region111: #{tpu_custom_call.1} parent=107 // pred_region
          %s1680 = sand.u32 %s309, 1
          %s1681 = scalar_lea.sflag [#allocation7], %s1680
          %s1682 = sand.u32 %s309, 1
          %s1683 = smul.addr %s1682, 8
          %s1684 = scalar_lea.vmem [#allocation17], %s1683
          %1685 = dma.done %s1681, 128
        $region112: #{tpu_custom_call.1} parent=107 // pred_fallthru
          _
        // Predicated region
        $region113: #{tpu_custom_call.1} parent=107 // pred_check
          %p1686 = pneg %p352
        $region114: #{tpu_custom_call.1} parent=107 // pred_check_branch
          %1688 = sbr.rel (%p1686) target = $region116
        $region115: #{tpu_custom_call.1} parent=107 // pred_region
          %s1689 = sand.u32 %s337, 1
          %s1690 = scalar_lea.sflag [#allocation19], %s1689
          %s1691 = sand.u32 %s337, 1
          %s1692 = smul.addr %s1691, 32
          %s1693 = scalar_lea.vmem [#allocation18], %s1692
          %1694 = dma.done %s1690, 512
        $region116: #{tpu_custom_call.1} parent=107 // pred_fallthru
          _
      $region108: #{tpu_custom_call.1} parent=5 // pred_fallthru
        _
    $region6: #{tpu_custom_call.1} parent=1 // loop_footer
      %s37 = sadd.s32 1, %s33
    $region7: #{tpu_custom_call.1} parent=1 // loop_footer_branch
      %32 = sbr.rel target = $region3
    $region8: #{tpu_custom_call.1} parent=1 // loop_exit
      _
    %1695 = vsyncpa [#allocation6], 1
    %s1696 = scalar_lea.sflag [#allocation6], 1
    %1697 = vsyncpa %s1696, 1
    %1698 = vsyncpa [#allocation9], 1
    %s1699 = scalar_lea.sflag [#allocation9], 1
    %1700 = vsyncpa %s1699, 1
    %1701 = vsyncpa [#allocation12], 1
    %1702 = vsyncpa [#allocation15], 1
    %1703 = vsyncpa [#allocation7], 1
    %s1704 = scalar_lea.sflag [#allocation7], 1
    %1705 = vsyncpa %s1704, 1
    %1706 = vsyncpa [#allocation19], 1
    %s1707 = scalar_lea.sflag [#allocation19], 1
    %1708 = vsyncpa %s1707, 1

</llo_original>
